<compile_context>
chip_gen: v6e
topology: v6e:2x2x1
jax: 0.10.0
libtpu: 0.0.40
codegen_flags: <defaults>
</compile_context>

<pallas_src>
import jax
import jax.numpy as jnp
from jax.experimental import pallas as pl
from jax.experimental.pallas import tpu as pltpu

MAX_CHANNELS = 100
LANE = 128


def _round_up(n, m):
    return ((n + m - 1) // m) * m


def _pad_axis(a, target, axis):
    pad = target - a.shape[axis]
    if pad <= 0:
        return a
    widths = [(0, 0)] * a.ndim
    widths[axis] = (0, pad)
    return jnp.pad(a, widths)


# ---------------------------------------------------------------------------
# Pallas kernel: fused 3-layer SAGEConv (+ReLU after each layer).
# ---------------------------------------------------------------------------
def l3sage_kernel(x_ref, adj_ref, invdeg_ref,
                  w1l_ref, w1r_ref, b1_ref,
                  w2_ref, b2_ref,
                  w3_ref, b3_ref,
                  o_ref):
    # x_ref      : [N, F_in]     f32  node features
    # adj_ref    : [N, N]        bf16 edge COUNTS (adj[i, j] = #edges j->i)
    # invdeg_ref : [N, 1]        f32  1/deg_i (0 for isolated nodes)
    # w1l/w1r    : [F_in, H1p]   bf16 layer-1 neighbor / root weights (padded)
    # b1_ref     : [1, H1p]      f32
    # w2_ref     : [H1p, 2*H2p]  bf16 [W2l | W2r] concatenated along outputs
    # b2_ref     : [1, H2p]      f32
    # w3_ref     : [H2p, 2*H3p]  bf16 [W3l | W3r] concatenated along outputs
    # b3_ref     : [1, H3p]      f32
    # o_ref      : [N, H3p]      f32  (lane-dense; sliced to real width outside)
    a = adj_ref[...]                       # [N, N] bf16 counts
    inv_deg = invdeg_ref[...]              # [N, 1] f32
    x = x_ref[...]                         # [N, F_in] f32
    xb = x.astype(jnp.bfloat16)

    # ---- Layer 1: aggregate FIRST (cheap N*N*F_in matmul), then project.
    # mean_j x_j = (counts @ x) * inv_deg  (counts exact in bf16, scale in f32).
    agg_x = jnp.dot(a, xb, preferred_element_type=jnp.float32) * inv_deg
    h = jnp.dot(agg_x.astype(jnp.bfloat16), w1l_ref[...],
                preferred_element_type=jnp.float32)
    h += jnp.dot(xb, w1r_ref[...], preferred_element_type=jnp.float32)
    h = jnp.maximum(h + b1_ref[...], 0.0)                       # [N, H1p]
    # Dropout(p=0.1): identity in eval mode.

    def sage_relu(h_in, w_ref, b_ref):
        # Project first (F_out <= F_in here); one wide matmul covers both the
        # neighbor (W_l) and root (W_r) paths since they share the same LHS.
        f_out = b_ref.shape[-1]
        lr = jnp.dot(h_in.astype(jnp.bfloat16), w_ref[...],
                     preferred_element_type=jnp.float32)        # [N, 2*F_out]
        hl = lr[:, :f_out]
        hr = lr[:, f_out:]
        # Mean aggregation over in-neighbors, bf16 matmul + f32 row-scale.
        agg = jnp.dot(a, hl.astype(jnp.bfloat16),
                      preferred_element_type=jnp.float32) * inv_deg
        return jnp.maximum(agg + hr + b_ref[...], 0.0)

    h = sage_relu(h, w2_ref, b2_ref)                            # [N, H2p]
    # Dropout(p=0.1): identity in eval mode.
    o_ref[...] = sage_relu(h, w3_ref, b3_ref)                   # [N, H3p]


# ---------------------------------------------------------------------------
# Wrapper: pad/pack parameters, size VMEM, single gridless pallas_call.
# ---------------------------------------------------------------------------
def l3sageconv_forward(x, adj_counts, inv_deg, params):
    (w1l, w1r, b1), (w2l, w2r, b2), (w3l, w3r, b3) = params
    n, _ = x.shape
    h1, h2, h3 = w1l.shape[1], w2l.shape[1], w3l.shape[1]
    h1p, h2p, h3p = (_round_up(c, LANE) for c in (h1, h2, h3))

    # Pad all feature widths to 128-lane multiples; cast weights to bf16.
    w1l_p = _pad_axis(w1l, h1p, 1).astype(jnp.bfloat16)          # [F_in, H1p]
    w1r_p = _pad_axis(w1r, h1p, 1).astype(jnp.bfloat16)
    b1_p = _pad_axis(b1, h1p, 1)
    w2_p = jnp.concatenate(
        [_pad_axis(_pad_axis(w2l, h1p, 0), h2p, 1),
         _pad_axis(_pad_axis(w2r, h1p, 0), h2p, 1)],
        axis=1).astype(jnp.bfloat16)                             # [H1p, 2*H2p]
    b2_p = _pad_axis(b2, h2p, 1)
    w3_p = jnp.concatenate(
        [_pad_axis(_pad_axis(w3l, h2p, 0), h3p, 1),
         _pad_axis(_pad_axis(w3r, h2p, 0), h3p, 1)],
        axis=1).astype(jnp.bfloat16)                             # [H2p, 2*H3p]
    b3_p = _pad_axis(b3, h3p, 1)

    # Whole-array residency: set the scoped-VMEM limit explicitly (defaults are
    # only 16/32 MiB) and cap at the smallest physical VMEM (v7x: 64 MiB).
    est = (x.size * 4 + adj_counts.size * 2 + inv_deg.size * 4
           + (w1l_p.size + w1r_p.size + w2_p.size + w3_p.size) * 2
           + (b1_p.size + b2_p.size + b3_p.size) * 4
           + n * (h1p + 3 * h2p + 3 * h3p) * 4)
    vmem_bytes = int(min(max(2 * est + (4 << 20), 16 << 20), 64 << 20))

    vmem = pl.BlockSpec(memory_space=pltpu.MemorySpace.VMEM)
    out_p = pl.pallas_call(
        l3sage_kernel,
        out_shape=jax.ShapeDtypeStruct((n, h3p), jnp.float32),
        in_specs=[vmem] * 10,
        out_specs=vmem,
        compiler_params=pltpu.CompilerParams(vmem_limit_bytes=vmem_bytes),
    )(x, adj_counts, inv_deg,
      w1l_p, w1r_p, b1_p, w2_p, b2_p, w3_p, b3_p)
    return out_p[:, :h3]


# ---------------------------------------------------------------------------
# Plain-JAX glue (parameters + adjacency, computed once per graph).
# ---------------------------------------------------------------------------
def make_sage_params(key, f_in, f_out):
    k_l, k_r = jax.random.split(key, 2)
    lim = jnp.sqrt(6.0 / (f_in + f_out))
    # Stored pre-transposed ([F_in, F_out]); PyG bias lives on lin_l only.
    w_l = jax.random.uniform(k_l, (f_in, f_out), jnp.float32, -lim, lim)
    w_r = jax.random.uniform(k_r, (f_in, f_out), jnp.float32, -lim, lim)
    bias = jnp.zeros((1, f_out), jnp.float32)
    return w_l, w_r, bias


def build_adjacency(edge_index, num_nodes):
    # PyG convention: edge_index[0]=source, edge_index[1]=target; messages flow
    # src -> dst, mean-aggregated at dst.  Duplicate edges counted (scatter-mean
    # on multigraphs); no self-loops (SAGEConv default).  Counts in bf16 (exact
    # small integers); 1/deg kept as a separate f32 row-scale.
    src, dst = edge_index[0], edge_index[1]
    counts = jnp.zeros((num_nodes, num_nodes), jnp.float32)
    counts = counts.at[dst, src].add(1.0)
    deg = jnp.sum(counts, axis=1, keepdims=True)
    inv_deg = jnp.where(deg > 0.0, 1.0 / deg, 0.0)
    return counts.astype(jnp.bfloat16), inv_deg


# ---------------------------------------------------------------------------
if __name__ == "__main__":
    in_channels = 8
    out_channels = 4
    num_nodes = 16
    num_edges = 40

    h1 = MAX_CHANNELS * out_channels            # 400
    h2 = int(MAX_CHANNELS / 2) * out_channels   # 200
    h3 = out_channels                           # 4

    root = jax.random.PRNGKey(0)
    k_x, k_e, k1, k2, k3 = jax.random.split(root, 5)

    x = jax.random.normal(k_x, (num_nodes, in_channels), jnp.float32)
    edge_index = jax.random.randint(k_e, (2, num_edges), 0, num_nodes,
                                    dtype=jnp.int32)

    params = [
        make_sage_params(k1, in_channels, h1),
        make_sage_params(k2, h1, h2),
        make_sage_params(k3, h2, h3),
    ]

    # Adjacency depends only on the (static) graph -> built once, outside the
    # kernel call path.
    adj_counts, inv_deg = build_adjacency(edge_index, num_nodes)
    jax.block_until_ready((adj_counts, inv_deg))

    out = l3sageconv_forward(x, adj_counts, inv_deg, params)
    jax.block_until_ready(out)
    assert out.shape == (num_nodes, out_channels)
    print("KERNEL_OK")
</pallas_src>

<mosaic_0001>
module attributes {stable_mosaic.version = 11 : i64} {
  func.func @l3sage_kernel(%arg0: memref<16x8xf32, #tpu.memory_space<vmem>>, %arg1: memref<16x16xbf16, #tpu.memory_space<vmem>>, %arg2: memref<16x1xf32, #tpu.memory_space<vmem>>, %arg3: memref<8x512xbf16, #tpu.memory_space<vmem>>, %arg4: memref<8x512xbf16, #tpu.memory_space<vmem>>, %arg5: memref<1x512xf32, #tpu.memory_space<vmem>>, %arg6: memref<512x512xbf16, #tpu.memory_space<vmem>>, %arg7: memref<1x256xf32, #tpu.memory_space<vmem>>, %arg8: memref<256x256xbf16, #tpu.memory_space<vmem>>, %arg9: memref<1x128xf32, #tpu.memory_space<vmem>>, %arg10: memref<16x128xf32, #tpu.memory_space<vmem>>) attributes {dimension_semantics = [], scalar_prefetch = 0 : i64, scratch_operands = 0 : i64, tpu.core_type = #tpu.core_type<tc>} {
    %c0 = arith.constant 0 : index
    %c0_0 = arith.constant 0 : index
    %0 = vector.load %arg1[%c0, %c0_0] : memref<16x16xbf16, #tpu.memory_space<vmem>>, vector<16x16xbf16>
    %c0_1 = arith.constant 0 : index
    %c0_2 = arith.constant 0 : index
    %1 = vector.load %arg2[%c0_1, %c0_2] : memref<16x1xf32, #tpu.memory_space<vmem>>, vector<16x1xf32>
    %c0_3 = arith.constant 0 : index
    %c0_4 = arith.constant 0 : index
    %2 = vector.load %arg0[%c0_3, %c0_4] : memref<16x8xf32, #tpu.memory_space<vmem>>, vector<16x8xf32>
    %3 = arith.truncf %2 : vector<16x8xf32> to vector<16x8xbf16>
    %cst = arith.constant dense<0.000000e+00> : vector<16x8xf32>
    %4 = tpu.matmul %0, %3, %cst {dimension_numbers = #tpu.dot_dimension_numbers<[1], [0], [0], [1], [0, 0, 1, 1], [], []>} : vector<16x16xbf16>, vector<16x8xbf16>, vector<16x8xf32> -> vector<16x8xf32>
    %5 = vector.broadcast %1 : vector<16x1xf32> to vector<16x8xf32>
    %6 = arith.mulf %4, %5 : vector<16x8xf32>
    %7 = arith.truncf %6 : vector<16x8xf32> to vector<16x8xbf16>
    %c0_5 = arith.constant 0 : index
    %c0_6 = arith.constant 0 : index
    %8 = vector.load %arg3[%c0_5, %c0_6] : memref<8x512xbf16, #tpu.memory_space<vmem>>, vector<8x512xbf16>
    %cst_7 = arith.constant dense<0.000000e+00> : vector<16x512xf32>
    %9 = tpu.matmul %7, %8, %cst_7 {dimension_numbers = #tpu.dot_dimension_numbers<[1], [0], [0], [1], [0, 0, 1, 1], [], []>} : vector<16x8xbf16>, vector<8x512xbf16>, vector<16x512xf32> -> vector<16x512xf32>
    %c0_8 = arith.constant 0 : index
    %c0_9 = arith.constant 0 : index
    %10 = vector.load %arg4[%c0_8, %c0_9] : memref<8x512xbf16, #tpu.memory_space<vmem>>, vector<8x512xbf16>
    %cst_10 = arith.constant dense<0.000000e+00> : vector<16x512xf32>
    %11 = tpu.matmul %3, %10, %cst_10 {dimension_numbers = #tpu.dot_dimension_numbers<[1], [0], [0], [1], [0, 0, 1, 1], [], []>} : vector<16x8xbf16>, vector<8x512xbf16>, vector<16x512xf32> -> vector<16x512xf32>
    %12 = arith.addf %9, %11 : vector<16x512xf32>
    %c0_11 = arith.constant 0 : index
    %c0_12 = arith.constant 0 : index
    %13 = vector.load %arg5[%c0_11, %c0_12] : memref<1x512xf32, #tpu.memory_space<vmem>>, vector<1x512xf32>
    %14 = vector.broadcast %13 : vector<1x512xf32> to vector<16x512xf32>
    %15 = arith.addf %12, %14 : vector<16x512xf32>
    %cst_13 = arith.constant 0.000000e+00 : f32
    %16 = vector.broadcast %cst_13 : f32 to vector<16x512xf32>
    %17 = arith.maximumf %15, %16 : vector<16x512xf32>
    %18 = arith.truncf %17 : vector<16x512xf32> to vector<16x512xbf16>
    %c0_14 = arith.constant 0 : index
    %c0_15 = arith.constant 0 : index
    %19 = vector.load %arg6[%c0_14, %c0_15] : memref<512x512xbf16, #tpu.memory_space<vmem>>, vector<512x512xbf16>
    %cst_16 = arith.constant dense<0.000000e+00> : vector<16x512xf32>
    %20 = tpu.matmul %18, %19, %cst_16 {dimension_numbers = #tpu.dot_dimension_numbers<[1], [0], [0], [1], [0, 0, 1, 1], [], []>} : vector<16x512xbf16>, vector<512x512xbf16>, vector<16x512xf32> -> vector<16x512xf32>
    %21 = vector.extract_strided_slice %20 {offsets = [0, 0], sizes = [16, 256], strides = [1, 1]} : vector<16x512xf32> to vector<16x256xf32>
    %22 = vector.extract_strided_slice %20 {offsets = [0, 256], sizes = [16, 256], strides = [1, 1]} : vector<16x512xf32> to vector<16x256xf32>
    %23 = arith.truncf %21 : vector<16x256xf32> to vector<16x256xbf16>
    %cst_17 = arith.constant dense<0.000000e+00> : vector<16x256xf32>
    %24 = tpu.matmul %0, %23, %cst_17 {dimension_numbers = #tpu.dot_dimension_numbers<[1], [0], [0], [1], [0, 0, 1, 1], [], []>} : vector<16x16xbf16>, vector<16x256xbf16>, vector<16x256xf32> -> vector<16x256xf32>
    %25 = vector.broadcast %1 : vector<16x1xf32> to vector<16x256xf32>
    %26 = arith.mulf %24, %25 : vector<16x256xf32>
    %27 = arith.addf %26, %22 : vector<16x256xf32>
    %c0_18 = arith.constant 0 : index
    %c0_19 = arith.constant 0 : index
    %28 = vector.load %arg7[%c0_18, %c0_19] : memref<1x256xf32, #tpu.memory_space<vmem>>, vector<1x256xf32>
    %29 = vector.broadcast %28 : vector<1x256xf32> to vector<16x256xf32>
    %30 = arith.addf %27, %29 : vector<16x256xf32>
    %cst_20 = arith.constant 0.000000e+00 : f32
    %31 = vector.broadcast %cst_20 : f32 to vector<16x256xf32>
    %32 = arith.maximumf %30, %31 : vector<16x256xf32>
    %33 = arith.truncf %32 : vector<16x256xf32> to vector<16x256xbf16>
    %c0_21 = arith.constant 0 : index
    %c0_22 = arith.constant 0 : index
    %34 = vector.load %arg8[%c0_21, %c0_22] : memref<256x256xbf16, #tpu.memory_space<vmem>>, vector<256x256xbf16>
    %cst_23 = arith.constant dense<0.000000e+00> : vector<16x256xf32>
    %35 = tpu.matmul %33, %34, %cst_23 {dimension_numbers = #tpu.dot_dimension_numbers<[1], [0], [0], [1], [0, 0, 1, 1], [], []>} : vector<16x256xbf16>, vector<256x256xbf16>, vector<16x256xf32> -> vector<16x256xf32>
    %36 = vector.extract_strided_slice %35 {offsets = [0, 0], sizes = [16, 128], strides = [1, 1]} : vector<16x256xf32> to vector<16x128xf32>
    %37 = vector.extract_strided_slice %35 {offsets = [0, 128], sizes = [16, 128], strides = [1, 1]} : vector<16x256xf32> to vector<16x128xf32>
    %38 = arith.truncf %36 : vector<16x128xf32> to vector<16x128xbf16>
    %cst_24 = arith.constant dense<0.000000e+00> : vector<16x128xf32>
    %39 = tpu.matmul %0, %38, %cst_24 {dimension_numbers = #tpu.dot_dimension_numbers<[1], [0], [0], [1], [0, 0, 1, 1], [], []>} : vector<16x16xbf16>, vector<16x128xbf16>, vector<16x128xf32> -> vector<16x128xf32>
    %40 = vector.broadcast %1 : vector<16x1xf32> to vector<16x128xf32>
    %41 = arith.mulf %39, %40 : vector<16x128xf32>
    %42 = arith.addf %41, %37 : vector<16x128xf32>
    %c0_25 = arith.constant 0 : index
    %c0_26 = arith.constant 0 : index
    %43 = vector.load %arg9[%c0_25, %c0_26] : memref<1x128xf32, #tpu.memory_space<vmem>>, vector<1x128xf32>
    %44 = vector.broadcast %43 : vector<1x128xf32> to vector<16x128xf32>
    %45 = arith.addf %42, %44 : vector<16x128xf32>
    %cst_27 = arith.constant 0.000000e+00 : f32
    %46 = vector.broadcast %cst_27 : f32 to vector<16x128xf32>
    %47 = arith.maximumf %45, %46 : vector<16x128xf32>
    %c0_28 = arith.constant 0 : index
    %c0_29 = arith.constant 0 : index
    %48 = vector.load %arg10[%c0_28, %c0_29] : memref<16x128xf32, #tpu.memory_space<vmem>>, vector<16x128xf32>
    tpu.vector_store %arg10[%c0_28, %c0_29], %47 {strides = array<i32>} : memref<16x128xf32, #tpu.memory_space<vmem>>, vector<16x128xf32>,
    return
  }
}

</mosaic_0001>

<llo_original>
// kernel: tpu_custom_call.1
$region0: #{tpu_custom_call.1}
  #allocation0 [shape = 'u32[]', space=smem, size = 0x4, offset = 0x4, fixed_abs, tag = 'smem constant byte address 0x4 - core index']
  #allocation1 [shape = 'u32[144,128]{1,0:T(1,128)}', space=vmem, size = 0x12000, scoped, tag = 'internal scratch']
  %s0 = inlined_call_operand.vmem [shape: f32[16,8], index: 0, kind: input, shape index: {}]
  %s1 = inlined_call_operand.vmem [shape: bf16[16,16], index: 1, kind: input, shape index: {}]
  %s2 = inlined_call_operand.vmem [shape: f32[16,1], index: 2, kind: input, shape index: {}]
  %s3 = inlined_call_operand.vmem [shape: bf16[8,512], index: 3, kind: input, shape index: {}]
  %s4 = inlined_call_operand.vmem [shape: bf16[8,512], index: 4, kind: input, shape index: {}]
  %s5 = inlined_call_operand.vmem [shape: f32[1,512], index: 5, kind: input, shape index: {}]
  %s6 = inlined_call_operand.hbm [shape: bf16[512,512], index: 6, kind: input, shape index: {}]
  %s7 = inlined_call_operand.vmem [shape: f32[1,256], index: 7, kind: input, shape index: {}]
  %s8 = inlined_call_operand.hbm [shape: bf16[256,256], index: 8, kind: input, shape index: {}]
  %s9 = inlined_call_operand.vmem [shape: f32[1,128], index: 9, kind: input, shape index: {}]
  %s10 = inlined_call_operand.hbm [shape: f32[16,128], index: 10, kind: output, shape index: {}]
  %s11 = sld [smem:[#allocation0]]
  $region58: #{tpu_custom_call.1} parent=0
    _
  %s13 = ssub.s32 1, %s11
  %s14 = scalar_select 0, %s13, %s11
  $region1: #{tpu_custom_call.1} parent=0
    #allocation2 [shape = 'u8[524288]{0}', space=vmem, size = 0x80000, scoped, tag = 'input window, operand 6, single buffered']
    #allocation3 [shape = 's32[1]{0}', space=sflag, size = 0x4, scoped, tag = 'scoped memory for tpu_custom_call.1']
    #allocation4 [shape = 's32[1]{0}', space=sflag, size = 0x4, scoped, tag = 'scoped memory for tpu_custom_call.1']
    #allocation5 [shape = 'u8[131072]{0}', space=vmem, size = 0x20000, scoped, tag = 'input window, operand 8, single buffered']
    #allocation6 [shape = 's32[1]{0}', space=sflag, size = 0x4, scoped, tag = 'scoped memory for tpu_custom_call.1']
    #allocation7 [shape = 'u8[8192]{0}', space=vmem, size = 0x2000, scoped, tag = 'output window, operand 0, single buffered']
    %15 = vsyncpa [#allocation3], 0
    %16 = vsyncpa [#allocation6], 0
    %17 = vsyncpa [#allocation4], 0
    // Predicated region
    $region2: #{tpu_custom_call.1} parent=1 // pred_check
      _
    $region3: #{tpu_custom_call.1} parent=1 // pred_check_branch
      %19 = sbr.rel (0) target = $region5
    $region4: #{tpu_custom_call.1} parent=1 // pred_region
      _
    $region5: #{tpu_custom_call.1} parent=1 // pred_fallthru
      _
    // Predicated region
    $region6: #{tpu_custom_call.1} parent=1 // pred_check
      _
    $region7: #{tpu_custom_call.1} parent=1 // pred_check_branch
      %21 = sbr.rel (0) target = $region9
    $region8: #{tpu_custom_call.1} parent=1 // pred_region
      _
    $region9: #{tpu_custom_call.1} parent=1 // pred_fallthru
      _
    // Predicated region
    $region10: #{tpu_custom_call.1} parent=1 // pred_check
      _
    $region11: #{tpu_custom_call.1} parent=1 // pred_check_branch
      %23 = sbr.rel (0) target = $region13
    $region12: #{tpu_custom_call.1} parent=1 // pred_region
      _
    $region13: #{tpu_custom_call.1} parent=1 // pred_fallthru
      _
    // Predicated region
    $region14: #{tpu_custom_call.1} parent=1 // pred_check
      _
    $region15: #{tpu_custom_call.1} parent=1 // pred_check_branch
      %25 = sbr.rel (0) target = $region17
    $region16: #{tpu_custom_call.1} parent=1 // pred_region
      _
    $region17: #{tpu_custom_call.1} parent=1 // pred_fallthru
      _
    // Predicated region
    $region18: #{tpu_custom_call.1} parent=1 // pred_check
      _
    $region19: #{tpu_custom_call.1} parent=1 // pred_check_branch
      %27 = sbr.rel (0) target = $region21
    $region20: #{tpu_custom_call.1} parent=1 // pred_region
      _
    $region21: #{tpu_custom_call.1} parent=1 // pred_fallthru
      _
    // Predicated region
    $region22: #{tpu_custom_call.1} parent=1 // pred_check
      _
    $region23: #{tpu_custom_call.1} parent=1 // pred_check_branch
      %29 = sbr.rel (0) target = $region25
    $region24: #{tpu_custom_call.1} parent=1 // pred_region
      _
    $region25: #{tpu_custom_call.1} parent=1 // pred_fallthru
      _
    // Predicated region
    $region26: #{tpu_custom_call.1} parent=1 // pred_check
      _
    $region27: #{tpu_custom_call.1} parent=1 // pred_check_branch
      %31 = sbr.rel (0) target = $region29
    $region28: #{tpu_custom_call.1} parent=1 // pred_region
      %s33 = ssub.s32 16384, 16384
      %34 = vsyncadd [#allocation3], %s33
      %s35 = sshll.u32 [#allocation2], 4
      %s36 = int_to_ptr.vmem [resolvable:$true] %s35
      %41 = dma.hbm_to_vmem [thread:$0]  %s6, 16384, %s36, [#allocation3], 256, 256, 16
    $region29: #{tpu_custom_call.1} parent=1 // pred_fallthru
      _
    // Predicated region
    $region30: #{tpu_custom_call.1} parent=1 // pred_check
      _
    $region31: #{tpu_custom_call.1} parent=1 // pred_check_branch
      %43 = sbr.rel (0) target = $region33
    $region32: #{tpu_custom_call.1} parent=1 // pred_region
      _
    $region33: #{tpu_custom_call.1} parent=1 // pred_fallthru
      _
    // Predicated region
    $region34: #{tpu_custom_call.1} parent=1 // pred_check
      _
    $region35: #{tpu_custom_call.1} parent=1 // pred_check_branch
      %45 = sbr.rel (0) target = $region37
    $region36: #{tpu_custom_call.1} parent=1 // pred_region
      %s47 = ssub.s32 4096, 4096
      %48 = vsyncadd [#allocation6], %s47
      %s49 = sshll.u32 [#allocation5], 4
      %s50 = int_to_ptr.vmem [resolvable:$true] %s49
      %55 = dma.hbm_to_vmem [thread:$0]  %s8, 4096, %s50, [#allocation6], 128, 128, 8
    $region37: #{tpu_custom_call.1} parent=1 // pred_fallthru
      _
    // Predicated region
    $region38: #{tpu_custom_call.1} parent=1 // pred_check
      _
    $region39: #{tpu_custom_call.1} parent=1 // pred_check_branch
      %57 = sbr.rel (0) target = $region41
    $region40: #{tpu_custom_call.1} parent=1 // pred_region
      _
    $region41: #{tpu_custom_call.1} parent=1 // pred_fallthru
      _
    // Predicated region
    $region42: #{tpu_custom_call.1} parent=1 // pred_check
      _
    $region43: #{tpu_custom_call.1} parent=1 // pred_check_branch
      %59 = sbr.rel (0) target = $region45
    $region44: #{tpu_custom_call.1} parent=1 // pred_region
      %60 = dma.done [#allocation3], 16384
    $region45: #{tpu_custom_call.1} parent=1 // pred_fallthru
      _
    // Predicated region
    $region46: #{tpu_custom_call.1} parent=1 // pred_check
      _
    $region47: #{tpu_custom_call.1} parent=1 // pred_check_branch
      %62 = sbr.rel (0) target = $region49
    $region48: #{tpu_custom_call.1} parent=1 // pred_region
      %63 = dma.done [#allocation6], 4096
    $region49: #{tpu_custom_call.1} parent=1 // pred_fallthru
      _
    %v65 = vld [vmem:[%s1] sm:$0xf]
    %v66 = vld [vmem:[%s1 + $0x4] sm:$0xf]
    %v67 = vld [vmem:[%s2] sm:$0xff]
    %v68 = vld [vmem:[%s2 + $0x8] sm:$0xff]
    %v69 = vld [vmem:[%s0] sm:$0xff]
    %v70 = vld [vmem:[%s0 + $0x8] sm:$0xff]
    %v71 = vpack.c.bf16 %v70, %v69
    %v74 = vunpack.c.l.b16 %v65
    %v75 = vunpack.c.l.b16 %v66
    %v76 = vpack.c.b16 %v75, %v74
    %vm77 = vcmask 130048
    %v79 = vsel %vm77, %v76, 0
    %81 = vmatprep.subr.bf16.mxu0 0
    %82 = vmatpush1.bf16.msra.mxu0 0
    %83 = vmatprep.subr.bf16.mxu0 0
    %84 = vmatpush1.bf16.msra.mxu0 0
    %85 = vmatprep.subr.bf16.mxu0 0
    %86 = vmatpush1.bf16.msra.mxu0 0
    %87 = vmatprep.subr.bf16.mxu0 0
    %88 = vmatpush1.bf16.msra.mxu0 0
    %89 = vmatprep.subr.bf16.mxu0 0
    %90 = vmatpush1.bf16.msra.mxu0 0
    %91 = vmatprep.subr.bf16.mxu0 0
    %92 = vmatpush1.bf16.msra.mxu0 0
    %93 = vmatprep.subr.bf16.mxu0 0
    %94 = vmatpush1.bf16.msra.mxu0 0
    %95 = vmatprep.subr.bf16.mxu0 0
    %96 = vmatpush1.bf16.msra.mxu0 %v71
    %97 = vmatprep.subr.bf16.mxu0 0
    %98 = vmatpush2.bf16.msra.mxu0 0
    %99 = vmatprep.subr.bf16.mxu0 0
    %100 = vmatpush2.bf16.msra.mxu0 0
    %101 = vmatprep.subr.bf16.mxu0 0
    %102 = vmatpush2.bf16.msra.mxu0 0
    %103 = vmatprep.subr.bf16.mxu0 0
    %104 = vmatpush2.bf16.msra.mxu0 0
    %105 = vmatprep.subr.bf16.mxu0 0
    %106 = vmatpush2.bf16.msra.mxu0 0
    %107 = vmatprep.subr.bf16.mxu0 0
    %108 = vmatpush2.bf16.msra.mxu0 0
    %109 = vmatprep.subr.bf16.mxu0 0
    %110 = vmatpush2.bf16.msra.mxu0 0
    %111 = vmatprep.subr.bf16.mxu0 0
    %112 = vmatpush2.bf16.msra.mxu0 0
    %113 = vmatprep.mubr.bf16.mxu0 0
    %114 = vmatmul.mubr.bf16.gmra.mxu0 %v79
    %v115 = vpop.f32.mrf.mxu0
    %v116 = vadd.f32 0.0, %v115
    %v117 = vpop.f32.mrf.mxu0
    %v118 = vpop.f32.mrf.mxu0
    %v119 = vadd.f32 0.0, %v118
    %v120 = vpop.f32.mrf.mxu0
    %121 = vdwg.mxu0
    %123 = vset.pattern.permute.xlu0 0
    %124 = vperm.xlu0 %123, %v67
    %v125 = vpop.permute.xlu0 %124
    %128 = vset.pattern.permute.xlu0 0
    %129 = vperm.xlu0 %128, %v68
    %v130 = vpop.permute.xlu0 %129
    %v132 = vmul.f32 %v116, %v125
    %v133 = vmul.f32 %v119, %v130
    %v134 = vpack.c.bf16 %v133, %v132
    %v135 = vld [vmem:[%s3] sm:$0xff]
    %v136 = vld [vmem:[%s3 + $0x8] sm:$0xff]
    %v137 = vld [vmem:[%s4] sm:$0xff]
    %v138 = vld [vmem:[%s4 + $0x8] sm:$0xff]
    %v141 = vunpack.c.l.b16 %v137
    %v142 = vunpack.c.h.b16 %v137
    %v143 = vunpack.c.l.b16 %v138
    %v144 = vunpack.c.h.b16 %v138
    %v145 = vpack.c.b16 %v141, %v141
    %v146 = vpack.c.b16 %v142, %v142
    %v147 = vpack.c.b16 %v143, %v143
    %v148 = vpack.c.b16 %v144, %v144
    %vm149 = vcmask 64512
    %v151 = vsel %vm149, %v71, 0
    %vm153 = vcmask 1043456
    %v155 = vsel %vm153, %v145, 0
    %v158 = vsel %vm153, %v146, 0
    %v161 = vsel %vm153, %v147, 0
    %v164 = vsel %vm153, %v148, 0
    %166 = vmatprep.subr.bf16.mxu0 0
    %167 = vmatpush1.bf16.msra.mxu0 0
    %168 = vmatprep.subr.bf16.mxu0 0
    %169 = vmatpush1.bf16.msra.mxu0 0
    %170 = vmatprep.subr.bf16.mxu0 0
    %171 = vmatpush1.bf16.msra.mxu0 0
    %172 = vmatprep.subr.bf16.mxu0 0
    %173 = vmatpush1.bf16.msra.mxu0 0
    %174 = vmatprep.subr.bf16.mxu0 0
    %175 = vmatpush1.bf16.msra.mxu0 0
    %176 = vmatprep.subr.bf16.mxu0 0
    %177 = vmatpush1.bf16.msra.mxu0 0
    %178 = vmatprep.subr.bf16.mxu0 0
    %179 = vmatpush1.bf16.msra.mxu0 0
    %180 = vmatprep.subr.bf16.mxu0 %v158
    %181 = vmatpush1.bf16.msra.mxu0 %v155
    %182 = vmatprep.subr.bf16.mxu0 0
    %183 = vmatpush2.bf16.msra.mxu0 0
    %184 = vmatprep.subr.bf16.mxu0 0
    %185 = vmatpush2.bf16.msra.mxu0 0
    %186 = vmatprep.subr.bf16.mxu0 0
    %187 = vmatpush2.bf16.msra.mxu0 0
    %188 = vmatprep.subr.bf16.mxu0 0
    %189 = vmatpush2.bf16.msra.mxu0 0
    %190 = vmatprep.subr.bf16.mxu0 0
    %191 = vmatpush2.bf16.msra.mxu0 0
    %192 = vmatprep.subr.bf16.mxu0 0
    %193 = vmatpush2.bf16.msra.mxu0 0
    %194 = vmatprep.subr.bf16.mxu0 0
    %195 = vmatpush2.bf16.msra.mxu0 0
    %196 = vmatprep.subr.bf16.mxu0 0
    %197 = vmatpush2.bf16.msra.mxu0 0
    %198 = vmatprep.mubr.bf16.mxu0 0
    %199 = vmatmul.mubr.bf16.gmra.mxu0 %v151
    %v200 = vpop.f32.mrf.mxu0
    %v201 = vadd.f32 0.0, %v200
    %v202 = vpop.f32.mrf.mxu0
    %v203 = vadd.f32 0.0, %v202
    %v204 = vpop.f32.mrf.mxu0
    %v205 = vadd.f32 0.0, %v204
    %v206 = vpop.f32.mrf.mxu0
    %v207 = vadd.f32 0.0, %v206
    %208 = vdwg.mxu0
    %209 = vmatprep.subr.bf16.mxu0 0
    %210 = vmatpush1.bf16.msra.mxu0 0
    %211 = vmatprep.subr.bf16.mxu0 0
    %212 = vmatpush1.bf16.msra.mxu0 0
    %213 = vmatprep.subr.bf16.mxu0 0
    %214 = vmatpush1.bf16.msra.mxu0 0
    %215 = vmatprep.subr.bf16.mxu0 0
    %216 = vmatpush1.bf16.msra.mxu0 0
    %217 = vmatprep.subr.bf16.mxu0 0
    %218 = vmatpush1.bf16.msra.mxu0 0
    %219 = vmatprep.subr.bf16.mxu0 0
    %220 = vmatpush1.bf16.msra.mxu0 0
    %221 = vmatprep.subr.bf16.mxu0 0
    %222 = vmatpush1.bf16.msra.mxu0 0
    %223 = vmatprep.subr.bf16.mxu0 %v164
    %224 = vmatpush1.bf16.msra.mxu0 %v161
    %225 = vmatprep.subr.bf16.mxu0 0
    %226 = vmatpush2.bf16.msra.mxu0 0
    %227 = vmatprep.subr.bf16.mxu0 0
    %228 = vmatpush2.bf16.msra.mxu0 0
    %229 = vmatprep.subr.bf16.mxu0 0
    %230 = vmatpush2.bf16.msra.mxu0 0
    %231 = vmatprep.subr.bf16.mxu0 0
    %232 = vmatpush2.bf16.msra.mxu0 0
    %233 = vmatprep.subr.bf16.mxu0 0
    %234 = vmatpush2.bf16.msra.mxu0 0
    %235 = vmatprep.subr.bf16.mxu0 0
    %236 = vmatpush2.bf16.msra.mxu0 0
    %237 = vmatprep.subr.bf16.mxu0 0
    %238 = vmatpush2.bf16.msra.mxu0 0
    %239 = vmatprep.subr.bf16.mxu0 0
    %240 = vmatpush2.bf16.msra.mxu0 0
    %241 = vmatprep.mubr.bf16.mxu0 0
    %242 = vmatmul.mubr.bf16.gmra.mxu0 %v151
    %v243 = vpop.f32.mrf.mxu0
    %v244 = vadd.f32 0.0, %v243
    %v245 = vpop.f32.mrf.mxu0
    %v246 = vadd.f32 0.0, %v245
    %v247 = vpop.f32.mrf.mxu0
    %v248 = vadd.f32 0.0, %v247
    %v249 = vpop.f32.mrf.mxu0
    %v250 = vadd.f32 0.0, %v249
    %251 = vdwg.mxu0
    %v254 = vunpack.c.l.b16 %v135
    %v255 = vunpack.c.h.b16 %v135
    %v256 = vunpack.c.l.b16 %v136
    %v257 = vunpack.c.h.b16 %v136
    %v258 = vpack.c.b16 %v254, %v254
    %v259 = vpack.c.b16 %v255, %v255
    %v260 = vpack.c.b16 %v256, %v256
    %v261 = vpack.c.b16 %v257, %v257
    %v263 = vsel %vm149, %v134, 0
    %v266 = vsel %vm153, %v258, 0
    %v269 = vsel %vm153, %v259, 0
    %v272 = vsel %vm153, %v260, 0
    %v275 = vsel %vm153, %v261, 0
    %277 = vmatprep.subr.bf16.mxu0 0
    %278 = vmatpush1.bf16.msra.mxu0 0
    %279 = vmatprep.subr.bf16.mxu0 0
    %280 = vmatpush1.bf16.msra.mxu0 0
    %281 = vmatprep.subr.bf16.mxu0 0
    %282 = vmatpush1.bf16.msra.mxu0 0
    %283 = vmatprep.subr.bf16.mxu0 0
    %284 = vmatpush1.bf16.msra.mxu0 0
    %285 = vmatprep.subr.bf16.mxu0 0
    %286 = vmatpush1.bf16.msra.mxu0 0
    %287 = vmatprep.subr.bf16.mxu0 0
    %288 = vmatpush1.bf16.msra.mxu0 0
    %289 = vmatprep.subr.bf16.mxu0 0
    %290 = vmatpush1.bf16.msra.mxu0 0
    %291 = vmatprep.subr.bf16.mxu0 %v269
    %292 = vmatpush1.bf16.msra.mxu0 %v266
    %293 = vmatprep.subr.bf16.mxu0 0
    %294 = vmatpush2.bf16.msra.mxu0 0
    %295 = vmatprep.subr.bf16.mxu0 0
    %296 = vmatpush2.bf16.msra.mxu0 0
    %297 = vmatprep.subr.bf16.mxu0 0
    %298 = vmatpush2.bf16.msra.mxu0 0
    %299 = vmatprep.subr.bf16.mxu0 0
    %300 = vmatpush2.bf16.msra.mxu0 0
    %301 = vmatprep.subr.bf16.mxu0 0
    %302 = vmatpush2.bf16.msra.mxu0 0
    %303 = vmatprep.subr.bf16.mxu0 0
    %304 = vmatpush2.bf16.msra.mxu0 0
    %305 = vmatprep.subr.bf16.mxu0 0
    %306 = vmatpush2.bf16.msra.mxu0 0
    %307 = vmatprep.subr.bf16.mxu0 0
    %308 = vmatpush2.bf16.msra.mxu0 0
    %309 = vmatprep.mubr.bf16.mxu0 0
    %310 = vmatmul.mubr.bf16.gmra.mxu0 %v263
    %v311 = vpop.f32.mrf.mxu0
    %v312 = vadd.f32 %v201, %v311
    %v313 = vpop.f32.mrf.mxu0
    %v314 = vadd.f32 %v203, %v313
    %v315 = vpop.f32.mrf.mxu0
    %v316 = vadd.f32 %v205, %v315
    %v317 = vpop.f32.mrf.mxu0
    %v318 = vadd.f32 %v207, %v317
    %319 = vdwg.mxu0
    %320 = vmatprep.subr.bf16.mxu0 0
    %321 = vmatpush1.bf16.msra.mxu0 0
    %322 = vmatprep.subr.bf16.mxu0 0
    %323 = vmatpush1.bf16.msra.mxu0 0
    %324 = vmatprep.subr.bf16.mxu0 0
    %325 = vmatpush1.bf16.msra.mxu0 0
    %326 = vmatprep.subr.bf16.mxu0 0
    %327 = vmatpush1.bf16.msra.mxu0 0
    %328 = vmatprep.subr.bf16.mxu0 0
    %329 = vmatpush1.bf16.msra.mxu0 0
    %330 = vmatprep.subr.bf16.mxu0 0
    %331 = vmatpush1.bf16.msra.mxu0 0
    %332 = vmatprep.subr.bf16.mxu0 0
    %333 = vmatpush1.bf16.msra.mxu0 0
    %334 = vmatprep.subr.bf16.mxu0 %v275
    %335 = vmatpush1.bf16.msra.mxu0 %v272
    %336 = vmatprep.subr.bf16.mxu0 0
    %337 = vmatpush2.bf16.msra.mxu0 0
    %338 = vmatprep.subr.bf16.mxu0 0
    %339 = vmatpush2.bf16.msra.mxu0 0
    %340 = vmatprep.subr.bf16.mxu0 0
    %341 = vmatpush2.bf16.msra.mxu0 0
    %342 = vmatprep.subr.bf16.mxu0 0
    %343 = vmatpush2.bf16.msra.mxu0 0
    %344 = vmatprep.subr.bf16.mxu0 0
    %345 = vmatpush2.bf16.msra.mxu0 0
    %346 = vmatprep.subr.bf16.mxu0 0
    %347 = vmatpush2.bf16.msra.mxu0 0
    %348 = vmatprep.subr.bf16.mxu0 0
    %349 = vmatpush2.bf16.msra.mxu0 0
    %350 = vmatprep.subr.bf16.mxu0 0
    %351 = vmatpush2.bf16.msra.mxu0 0
    %352 = vmatprep.mubr.bf16.mxu0 0
    %353 = vmatmul.mubr.bf16.gmra.mxu0 %v263
    %v354 = vpop.f32.mrf.mxu0
    %v355 = vadd.f32 %v244, %v354
    %v356 = vpop.f32.mrf.mxu0
    %v357 = vadd.f32 %v246, %v356
    %v358 = vpop.f32.mrf.mxu0
    %v359 = vadd.f32 %v248, %v358
    %v360 = vpop.f32.mrf.mxu0
    %v361 = vadd.f32 %v250, %v360
    %362 = vdwg.mxu0
    %v363 = vld [vmem:[%s5] sm:$0xf]
    %v365 = vlaneseq
    %v366 = vshrl.u32 %v365, 7
    %v367 = vsub.s32 0, %v366
    %v368 = vrot.slane %v363, %v367
    %v369 = vlaneseq
    %v370 = vshrl.u32 %v369, 7
    %v371 = vsub.s32 1, %v370
    %v372 = vrot.slane %v363, %v371
    %v373 = vlaneseq
    %v374 = vshrl.u32 %v373, 7
    %v375 = vsub.s32 2, %v374
    %v376 = vrot.slane %v363, %v375
    %v377 = vlaneseq
    %v378 = vshrl.u32 %v377, 7
    %v379 = vsub.s32 3, %v378
    %v380 = vrot.slane %v363, %v379
    %v385 = vadd.f32 %v312, %v368
    %v386 = vadd.f32 %v314, %v372
    %v387 = vadd.f32 %v355, %v376
    %v388 = vadd.f32 %v357, %v380
    %v389 = vadd.f32 %v316, %v368
    %v390 = vadd.f32 %v318, %v372
    %v391 = vadd.f32 %v359, %v376
    %v392 = vadd.f32 %v361, %v380
    %v393 = vmax.f32 %v385, 0.0
    %v394 = vmax.f32 %v386, 0.0
    %v395 = vmax.f32 %v387, 0.0
    %v396 = vmax.f32 %v388, 0.0
    %v397 = vmax.f32 %v389, 0.0
    %v398 = vmax.f32 %v390, 0.0
    %v399 = vmax.f32 %v391, 0.0
    %v400 = vmax.f32 %v392, 0.0
    %v401 = vpack.c.bf16 %v397, %v393
    %v402 = vpack.c.bf16 %v398, %v394
    %v403 = vpack.c.bf16 %v399, %v395
    %v404 = vpack.c.bf16 %v400, %v396
    %v405 = vld [vmem:[#allocation2] sm:$0xff]
    %v406 = vld [vmem:[#allocation2 + $0x8] sm:$0xff]
    %v407 = vld [vmem:[#allocation2 + $0x10] sm:$0xff]
    %v408 = vld [vmem:[#allocation2 + $0x18] sm:$0xff]
    %v409 = vld [vmem:[#allocation2 + $0x20] sm:$0xff]
    %v410 = vld [vmem:[#allocation2 + $0x28] sm:$0xff]
    %v411 = vld [vmem:[#allocation2 + $0x30] sm:$0xff]
    %v412 = vld [vmem:[#allocation2 + $0x38] sm:$0xff]
    %v413 = vld [vmem:[#allocation2 + $0x40] sm:$0xff]
    %v414 = vld [vmem:[#allocation2 + $0x48] sm:$0xff]
    %v415 = vld [vmem:[#allocation2 + $0x50] sm:$0xff]
    %v416 = vld [vmem:[#allocation2 + $0x58] sm:$0xff]
    %v417 = vld [vmem:[#allocation2 + $0x60] sm:$0xff]
    %v418 = vld [vmem:[#allocation2 + $0x68] sm:$0xff]
    %v419 = vld [vmem:[#allocation2 + $0x70] sm:$0xff]
    %v420 = vld [vmem:[#allocation2 + $0x78] sm:$0xff]
    %v421 = vld [vmem:[#allocation2 + $0x80] sm:$0xff]
    %v422 = vld [vmem:[#allocation2 + $0x88] sm:$0xff]
    %v423 = vld [vmem:[#allocation2 + $0x90] sm:$0xff]
    %v424 = vld [vmem:[#allocation2 + $0x98] sm:$0xff]
    %v425 = vld [vmem:[#allocation2 + $0xa0] sm:$0xff]
    %v426 = vld [vmem:[#allocation2 + $0xa8] sm:$0xff]
    %v427 = vld [vmem:[#allocation2 + $0xb0] sm:$0xff]
    %v428 = vld [vmem:[#allocation2 + $0xb8] sm:$0xff]
    %v429 = vld [vmem:[#allocation2 + $0xc0] sm:$0xff]
    %v430 = vld [vmem:[#allocation2 + $0xc8] sm:$0xff]
    %v431 = vld [vmem:[#allocation2 + $0xd0] sm:$0xff]
    %v432 = vld [vmem:[#allocation2 + $0xd8] sm:$0xff]
    %v433 = vld [vmem:[#allocation2 + $0xe0] sm:$0xff]
    %v434 = vld [vmem:[#allocation2 + $0xe8] sm:$0xff]
    %v435 = vld [vmem:[#allocation2 + $0xf0] sm:$0xff]
    %v436 = vld [vmem:[#allocation2 + $0xf8] sm:$0xff]
    %v437 = vld [vmem:[#allocation2 + $0x100] sm:$0xff]
    %v438 = vld [vmem:[#allocation2 + $0x108] sm:$0xff]
    %v439 = vld [vmem:[#allocation2 + $0x110] sm:$0xff]
    %v440 = vld [vmem:[#allocation2 + $0x118] sm:$0xff]
    %v441 = vld [vmem:[#allocation2 + $0x120] sm:$0xff]
    %v442 = vld [vmem:[#allocation2 + $0x128] sm:$0xff]
    %v443 = vld [vmem:[#allocation2 + $0x130] sm:$0xff]
    %v444 = vld [vmem:[#allocation2 + $0x138] sm:$0xff]
    %v445 = vld [vmem:[#allocation2 + $0x140] sm:$0xff]
    %v446 = vld [vmem:[#allocation2 + $0x148] sm:$0xff]
    %v447 = vld [vmem:[#allocation2 + $0x150] sm:$0xff]
    %v448 = vld [vmem:[#allocation2 + $0x158] sm:$0xff]
    %v449 = vld [vmem:[#allocation2 + $0x160] sm:$0xff]
    %v450 = vld [vmem:[#allocation2 + $0x168] sm:$0xff]
    %v451 = vld [vmem:[#allocation2 + $0x170] sm:$0xff]
    %v452 = vld [vmem:[#allocation2 + $0x178] sm:$0xff]
    %v453 = vld [vmem:[#allocation2 + $0x180] sm:$0xff]
    %v454 = vld [vmem:[#allocation2 + $0x188] sm:$0xff]
    %v455 = vld [vmem:[#allocation2 + $0x190] sm:$0xff]
    %v456 = vld [vmem:[#allocation2 + $0x198] sm:$0xff]
    %v457 = vld [vmem:[#allocation2 + $0x1a0] sm:$0xff]
    %v458 = vld [vmem:[#allocation2 + $0x1a8] sm:$0xff]
    %v459 = vld [vmem:[#allocation2 + $0x1b0] sm:$0xff]
    %v460 = vld [vmem:[#allocation2 + $0x1b8] sm:$0xff]
    %v461 = vld [vmem:[#allocation2 + $0x1c0] sm:$0xff]
    %v462 = vld [vmem:[#allocation2 + $0x1c8] sm:$0xff]
    %v463 = vld [vmem:[#allocation2 + $0x1d0] sm:$0xff]
    %v464 = vld [vmem:[#allocation2 + $0x1d8] sm:$0xff]
    %v465 = vld [vmem:[#allocation2 + $0x1e0] sm:$0xff]
    %v466 = vld [vmem:[#allocation2 + $0x1e8] sm:$0xff]
    %v467 = vld [vmem:[#allocation2 + $0x1f0] sm:$0xff]
    %v468 = vld [vmem:[#allocation2 + $0x1f8] sm:$0xff]
    %v469 = vld [vmem:[#allocation2 + $0x200] sm:$0xff]
    %v470 = vld [vmem:[#allocation2 + $0x208] sm:$0xff]
    %v471 = vld [vmem:[#allocation2 + $0x210] sm:$0xff]
    %v472 = vld [vmem:[#allocation2 + $0x218] sm:$0xff]
    %v473 = vld [vmem:[#allocation2 + $0x220] sm:$0xff]
    %v474 = vld [vmem:[#allocation2 + $0x228] sm:$0xff]
    %v475 = vld [vmem:[#allocation2 + $0x230] sm:$0xff]
    %v476 = vld [vmem:[#allocation2 + $0x238] sm:$0xff]
    %v477 = vld [vmem:[#allocation2 + $0x240] sm:$0xff]
    %v478 = vld [vmem:[#allocation2 + $0x248] sm:$0xff]
    %v479 = vld [vmem:[#allocation2 + $0x250] sm:$0xff]
    %v480 = vld [vmem:[#allocation2 + $0x258] sm:$0xff]
    %v481 = vld [vmem:[#allocation2 + $0x260] sm:$0xff]
    %v482 = vld [vmem:[#allocation2 + $0x268] sm:$0xff]
    %v483 = vld [vmem:[#allocation2 + $0x270] sm:$0xff]
    %v484 = vld [vmem:[#allocation2 + $0x278] sm:$0xff]
    %v485 = vld [vmem:[#allocation2 + $0x280] sm:$0xff]
    %v486 = vld [vmem:[#allocation2 + $0x288] sm:$0xff]
    %v487 = vld [vmem:[#allocation2 + $0x290] sm:$0xff]
    %v488 = vld [vmem:[#allocation2 + $0x298] sm:$0xff]
    %v489 = vld [vmem:[#allocation2 + $0x2a0] sm:$0xff]
    %v490 = vld [vmem:[#allocation2 + $0x2a8] sm:$0xff]
    %v491 = vld [vmem:[#allocation2 + $0x2b0] sm:$0xff]
    %v492 = vld [vmem:[#allocation2 + $0x2b8] sm:$0xff]
    %v493 = vld [vmem:[#allocation2 + $0x2c0] sm:$0xff]
    %v494 = vld [vmem:[#allocation2 + $0x2c8] sm:$0xff]
    %v495 = vld [vmem:[#allocation2 + $0x2d0] sm:$0xff]
    %v496 = vld [vmem:[#allocation2 + $0x2d8] sm:$0xff]
    %v497 = vld [vmem:[#allocation2 + $0x2e0] sm:$0xff]
    %v498 = vld [vmem:[#allocation2 + $0x2e8] sm:$0xff]
    %v499 = vld [vmem:[#allocation2 + $0x2f0] sm:$0xff]
    %v500 = vld [vmem:[#allocation2 + $0x2f8] sm:$0xff]
    %v501 = vld [vmem:[#allocation2 + $0x300] sm:$0xff]
    %v502 = vld [vmem:[#allocation2 + $0x308] sm:$0xff]
    %v503 = vld [vmem:[#allocation2 + $0x310] sm:$0xff]
    %v504 = vld [vmem:[#allocation2 + $0x318] sm:$0xff]
    %v505 = vld [vmem:[#allocation2 + $0x320] sm:$0xff]
    %v506 = vld [vmem:[#allocation2 + $0x328] sm:$0xff]
    %v507 = vld [vmem:[#allocation2 + $0x330] sm:$0xff]
    %v508 = vld [vmem:[#allocation2 + $0x338] sm:$0xff]
    %v509 = vld [vmem:[#allocation2 + $0x340] sm:$0xff]
    %v510 = vld [vmem:[#allocation2 + $0x348] sm:$0xff]
    %v511 = vld [vmem:[#allocation2 + $0x350] sm:$0xff]
    %v512 = vld [vmem:[#allocation2 + $0x358] sm:$0xff]
    %v513 = vld [vmem:[#allocation2 + $0x360] sm:$0xff]
    %v514 = vld [vmem:[#allocation2 + $0x368] sm:$0xff]
    %v515 = vld [vmem:[#allocation2 + $0x370] sm:$0xff]
    %v516 = vld [vmem:[#allocation2 + $0x378] sm:$0xff]
    %v517 = vld [vmem:[#allocation2 + $0x380] sm:$0xff]
    %v518 = vld [vmem:[#allocation2 + $0x388] sm:$0xff]
    %v519 = vld [vmem:[#allocation2 + $0x390] sm:$0xff]
    %v520 = vld [vmem:[#allocation2 + $0x398] sm:$0xff]
    %v521 = vld [vmem:[#allocation2 + $0x3a0] sm:$0xff]
    %v522 = vld [vmem:[#allocation2 + $0x3a8] sm:$0xff]
    %v523 = vld [vmem:[#allocation2 + $0x3b0] sm:$0xff]
    %v524 = vld [vmem:[#allocation2 + $0x3b8] sm:$0xff]
    %v525 = vld [vmem:[#allocation2 + $0x3c0] sm:$0xff]
    %v526 = vld [vmem:[#allocation2 + $0x3c8] sm:$0xff]
    %v527 = vld [vmem:[#allocation2 + $0x3d0] sm:$0xff]
    %v528 = vld [vmem:[#allocation2 + $0x3d8] sm:$0xff]
    %v529 = vld [vmem:[#allocation2 + $0x3e0] sm:$0xff]
    %v530 = vld [vmem:[#allocation2 + $0x3e8] sm:$0xff]
    %v531 = vld [vmem:[#allocation2 + $0x3f0] sm:$0xff]
    %v532 = vld [vmem:[#allocation2 + $0x3f8] sm:$0xff]
    %v661 = vunpack.c.l.b16 %v405
    %v662 = vunpack.c.h.b16 %v405
    %v663 = vunpack.c.l.b16 %v406
    %v664 = vunpack.c.h.b16 %v406
    %v665 = vunpack.c.l.b16 %v407
    %v666 = vunpack.c.h.b16 %v407
    %v667 = vunpack.c.l.b16 %v408
    %v668 = vunpack.c.h.b16 %v408
    %v669 = vunpack.c.l.b16 %v409
    %v670 = vunpack.c.h.b16 %v409
    %v671 = vunpack.c.l.b16 %v410
    %v672 = vunpack.c.h.b16 %v410
    %v673 = vunpack.c.l.b16 %v411
    %v674 = vunpack.c.h.b16 %v411
    %v675 = vunpack.c.l.b16 %v412
    %v676 = vunpack.c.h.b16 %v412
    %v677 = vunpack.c.l.b16 %v413
    %v678 = vunpack.c.h.b16 %v413
    %v679 = vunpack.c.l.b16 %v414
    %v680 = vunpack.c.h.b16 %v414
    %v681 = vunpack.c.l.b16 %v415
    %v682 = vunpack.c.h.b16 %v415
    %v683 = vunpack.c.l.b16 %v416
    %v684 = vunpack.c.h.b16 %v416
    %v685 = vunpack.c.l.b16 %v417
    %v686 = vunpack.c.h.b16 %v417
    %v687 = vunpack.c.l.b16 %v418
    %v688 = vunpack.c.h.b16 %v418
    %v689 = vunpack.c.l.b16 %v419
    %v690 = vunpack.c.h.b16 %v419
    %v691 = vunpack.c.l.b16 %v420
    %v692 = vunpack.c.h.b16 %v420
    %v693 = vunpack.c.l.b16 %v421
    %v694 = vunpack.c.h.b16 %v421
    %v695 = vunpack.c.l.b16 %v422
    %v696 = vunpack.c.h.b16 %v422
    %v697 = vunpack.c.l.b16 %v423
    %v698 = vunpack.c.h.b16 %v423
    %v699 = vunpack.c.l.b16 %v424
    %v700 = vunpack.c.h.b16 %v424
    %v701 = vunpack.c.l.b16 %v425
    %v702 = vunpack.c.h.b16 %v425
    %v703 = vunpack.c.l.b16 %v426
    %v704 = vunpack.c.h.b16 %v426
    %v705 = vunpack.c.l.b16 %v427
    %v706 = vunpack.c.h.b16 %v427
    %v707 = vunpack.c.l.b16 %v428
    %v708 = vunpack.c.h.b16 %v428
    %v709 = vunpack.c.l.b16 %v429
    %v710 = vunpack.c.h.b16 %v429
    %v711 = vunpack.c.l.b16 %v430
    %v712 = vunpack.c.h.b16 %v430
    %v713 = vunpack.c.l.b16 %v431
    %v714 = vunpack.c.h.b16 %v431
    %v715 = vunpack.c.l.b16 %v432
    %v716 = vunpack.c.h.b16 %v432
    %v717 = vunpack.c.l.b16 %v433
    %v718 = vunpack.c.h.b16 %v433
    %v719 = vunpack.c.l.b16 %v434
    %v720 = vunpack.c.h.b16 %v434
    %v721 = vunpack.c.l.b16 %v435
    %v722 = vunpack.c.h.b16 %v435
    %v723 = vunpack.c.l.b16 %v436
    %v724 = vunpack.c.h.b16 %v436
    %v725 = vunpack.c.l.b16 %v437
    %v726 = vunpack.c.h.b16 %v437
    %v727 = vunpack.c.l.b16 %v438
    %v728 = vunpack.c.h.b16 %v438
    %v729 = vunpack.c.l.b16 %v439
    %v730 = vunpack.c.h.b16 %v439
    %v731 = vunpack.c.l.b16 %v440
    %v732 = vunpack.c.h.b16 %v440
    %v733 = vunpack.c.l.b16 %v441
    %v734 = vunpack.c.h.b16 %v441
    %v735 = vunpack.c.l.b16 %v442
    %v736 = vunpack.c.h.b16 %v442
    %v737 = vunpack.c.l.b16 %v443
    %v738 = vunpack.c.h.b16 %v443
    %v739 = vunpack.c.l.b16 %v444
    %v740 = vunpack.c.h.b16 %v444
    %v741 = vunpack.c.l.b16 %v445
    %v742 = vunpack.c.h.b16 %v445
    %v743 = vunpack.c.l.b16 %v446
    %v744 = vunpack.c.h.b16 %v446
    %v745 = vunpack.c.l.b16 %v447
    %v746 = vunpack.c.h.b16 %v447
    %v747 = vunpack.c.l.b16 %v448
    %v748 = vunpack.c.h.b16 %v448
    %v749 = vunpack.c.l.b16 %v449
    %v750 = vunpack.c.h.b16 %v449
    %v751 = vunpack.c.l.b16 %v450
    %v752 = vunpack.c.h.b16 %v450
    %v753 = vunpack.c.l.b16 %v451
    %v754 = vunpack.c.h.b16 %v451
    %v755 = vunpack.c.l.b16 %v452
    %v756 = vunpack.c.h.b16 %v452
    %v757 = vunpack.c.l.b16 %v453
    %v758 = vunpack.c.h.b16 %v453
    %v759 = vunpack.c.l.b16 %v454
    %v760 = vunpack.c.h.b16 %v454
    %v761 = vunpack.c.l.b16 %v455
    %v762 = vunpack.c.h.b16 %v455
    %v763 = vunpack.c.l.b16 %v456
    %v764 = vunpack.c.h.b16 %v456
    %v765 = vunpack.c.l.b16 %v457
    %v766 = vunpack.c.h.b16 %v457
    %v767 = vunpack.c.l.b16 %v458
    %v768 = vunpack.c.h.b16 %v458
    %v769 = vunpack.c.l.b16 %v459
    %v770 = vunpack.c.h.b16 %v459
    %v771 = vunpack.c.l.b16 %v460
    %v772 = vunpack.c.h.b16 %v460
    %v773 = vunpack.c.l.b16 %v461
    %v774 = vunpack.c.h.b16 %v461
    %v775 = vunpack.c.l.b16 %v462
    %v776 = vunpack.c.h.b16 %v462
    %v777 = vunpack.c.l.b16 %v463
    %v778 = vunpack.c.h.b16 %v463
    %v779 = vunpack.c.l.b16 %v464
    %v780 = vunpack.c.h.b16 %v464
    %v781 = vunpack.c.l.b16 %v465
    %v782 = vunpack.c.h.b16 %v465
    %v783 = vunpack.c.l.b16 %v466
    %v784 = vunpack.c.h.b16 %v466
    %v785 = vunpack.c.l.b16 %v467
    %v786 = vunpack.c.h.b16 %v467
    %v787 = vunpack.c.l.b16 %v468
    %v788 = vunpack.c.h.b16 %v468
    %v789 = vunpack.c.l.b16 %v469
    %v790 = vunpack.c.h.b16 %v469
    %v791 = vunpack.c.l.b16 %v470
    %v792 = vunpack.c.h.b16 %v470
    %v793 = vunpack.c.l.b16 %v471
    %v794 = vunpack.c.h.b16 %v471
    %v795 = vunpack.c.l.b16 %v472
    %v796 = vunpack.c.h.b16 %v472
    %v797 = vunpack.c.l.b16 %v473
    %v798 = vunpack.c.h.b16 %v473
    %v799 = vunpack.c.l.b16 %v474
    %v800 = vunpack.c.h.b16 %v474
    %v801 = vunpack.c.l.b16 %v475
    %v802 = vunpack.c.h.b16 %v475
    %v803 = vunpack.c.l.b16 %v476
    %v804 = vunpack.c.h.b16 %v476
    %v805 = vunpack.c.l.b16 %v477
    %v806 = vunpack.c.h.b16 %v477
    %v807 = vunpack.c.l.b16 %v478
    %v808 = vunpack.c.h.b16 %v478
    %v809 = vunpack.c.l.b16 %v479
    %v810 = vunpack.c.h.b16 %v479
    %v811 = vunpack.c.l.b16 %v480
    %v812 = vunpack.c.h.b16 %v480
    %v813 = vunpack.c.l.b16 %v481
    %v814 = vunpack.c.h.b16 %v481
    %v815 = vunpack.c.l.b16 %v482
    %v816 = vunpack.c.h.b16 %v482
    %v817 = vunpack.c.l.b16 %v483
    %v818 = vunpack.c.h.b16 %v483
    %v819 = vunpack.c.l.b16 %v484
    %v820 = vunpack.c.h.b16 %v484
    %v821 = vunpack.c.l.b16 %v485
    %v822 = vunpack.c.h.b16 %v485
    %v823 = vunpack.c.l.b16 %v486
    %v824 = vunpack.c.h.b16 %v486
    %v825 = vunpack.c.l.b16 %v487
    %v826 = vunpack.c.h.b16 %v487
    %v827 = vunpack.c.l.b16 %v488
    %v828 = vunpack.c.h.b16 %v488
    %v829 = vunpack.c.l.b16 %v489
    %v830 = vunpack.c.h.b16 %v489
    %v831 = vunpack.c.l.b16 %v490
    %v832 = vunpack.c.h.b16 %v490
    %v833 = vunpack.c.l.b16 %v491
    %v834 = vunpack.c.h.b16 %v491
    %v835 = vunpack.c.l.b16 %v492
    %v836 = vunpack.c.h.b16 %v492
    %v837 = vunpack.c.l.b16 %v493
    %v838 = vunpack.c.h.b16 %v493
    %v839 = vunpack.c.l.b16 %v494
    %v840 = vunpack.c.h.b16 %v494
    %v841 = vunpack.c.l.b16 %v495
    %v842 = vunpack.c.h.b16 %v495
    %v843 = vunpack.c.l.b16 %v496
    %v844 = vunpack.c.h.b16 %v496
    %v845 = vunpack.c.l.b16 %v497
    %v846 = vunpack.c.h.b16 %v497
    %v847 = vunpack.c.l.b16 %v498
    %v848 = vunpack.c.h.b16 %v498
    %v849 = vunpack.c.l.b16 %v499
    %v850 = vunpack.c.h.b16 %v499
    %v851 = vunpack.c.l.b16 %v500
    %v852 = vunpack.c.h.b16 %v500
    %v853 = vunpack.c.l.b16 %v501
    %v854 = vunpack.c.h.b16 %v501
    %v855 = vunpack.c.l.b16 %v502
    %v856 = vunpack.c.h.b16 %v502
    %v857 = vunpack.c.l.b16 %v503
    %v858 = vunpack.c.h.b16 %v503
    %v859 = vunpack.c.l.b16 %v504
    %v860 = vunpack.c.h.b16 %v504
    %v861 = vunpack.c.l.b16 %v505
    %v862 = vunpack.c.h.b16 %v505
    %v863 = vunpack.c.l.b16 %v506
    %v864 = vunpack.c.h.b16 %v506
    %v865 = vunpack.c.l.b16 %v507
    %v866 = vunpack.c.h.b16 %v507
    %v867 = vunpack.c.l.b16 %v508
    %v868 = vunpack.c.h.b16 %v508
    %v869 = vunpack.c.l.b16 %v509
    %v870 = vunpack.c.h.b16 %v509
    %v871 = vunpack.c.l.b16 %v510
    %v872 = vunpack.c.h.b16 %v510
    %v873 = vunpack.c.l.b16 %v511
    %v874 = vunpack.c.h.b16 %v511
    %v875 = vunpack.c.l.b16 %v512
    %v876 = vunpack.c.h.b16 %v512
    %v877 = vunpack.c.l.b16 %v513
    %v878 = vunpack.c.h.b16 %v513
    %v879 = vunpack.c.l.b16 %v514
    %v880 = vunpack.c.h.b16 %v514
    %v881 = vunpack.c.l.b16 %v515
    %v882 = vunpack.c.h.b16 %v515
    %v883 = vunpack.c.l.b16 %v516
    %v884 = vunpack.c.h.b16 %v516
    %v885 = vunpack.c.l.b16 %v517
    %v886 = vunpack.c.h.b16 %v517
    %v887 = vunpack.c.l.b16 %v518
    %v888 = vunpack.c.h.b16 %v518
    %v889 = vunpack.c.l.b16 %v519
    %v890 = vunpack.c.h.b16 %v519
    %v891 = vunpack.c.l.b16 %v520
    %v892 = vunpack.c.h.b16 %v520
    %v893 = vunpack.c.l.b16 %v521
    %v894 = vunpack.c.h.b16 %v521
    %v895 = vunpack.c.l.b16 %v522
    %v896 = vunpack.c.h.b16 %v522
    %v897 = vunpack.c.l.b16 %v523
    %v898 = vunpack.c.h.b16 %v523
    %v899 = vunpack.c.l.b16 %v524
    %v900 = vunpack.c.h.b16 %v524
    %v901 = vunpack.c.l.b16 %v525
    %v902 = vunpack.c.h.b16 %v525
    %v903 = vunpack.c.l.b16 %v526
    %v904 = vunpack.c.h.b16 %v526
    %v905 = vunpack.c.l.b16 %v527
    %v906 = vunpack.c.h.b16 %v527
    %v907 = vunpack.c.l.b16 %v528
    %v908 = vunpack.c.h.b16 %v528
    %v909 = vunpack.c.l.b16 %v529
    %v910 = vunpack.c.h.b16 %v529
    %v911 = vunpack.c.l.b16 %v530
    %v912 = vunpack.c.h.b16 %v530
    %v913 = vunpack.c.l.b16 %v531
    %v914 = vunpack.c.h.b16 %v531
    %v915 = vunpack.c.l.b16 %v532
    %v916 = vunpack.c.h.b16 %v532
    %v917 = vpack.c.b16 %v665, %v661
    %v918 = vpack.c.b16 %v666, %v662
    %v919 = vpack.c.b16 %v667, %v663
    %v920 = vpack.c.b16 %v668, %v664
    %v921 = vpack.c.b16 %v673, %v669
    %v922 = vpack.c.b16 %v674, %v670
    %v923 = vpack.c.b16 %v675, %v671
    %v924 = vpack.c.b16 %v676, %v672
    %v925 = vpack.c.b16 %v681, %v677
    %v926 = vpack.c.b16 %v682, %v678
    %v927 = vpack.c.b16 %v683, %v679
    %v928 = vpack.c.b16 %v684, %v680
    %v929 = vpack.c.b16 %v689, %v685
    %v930 = vpack.c.b16 %v690, %v686
    %v931 = vpack.c.b16 %v691, %v687
    %v932 = vpack.c.b16 %v692, %v688
    %v933 = vpack.c.b16 %v697, %v693
    %v934 = vpack.c.b16 %v698, %v694
    %v935 = vpack.c.b16 %v699, %v695
    %v936 = vpack.c.b16 %v700, %v696
    %v937 = vpack.c.b16 %v705, %v701
    %v938 = vpack.c.b16 %v706, %v702
    %v939 = vpack.c.b16 %v707, %v703
    %v940 = vpack.c.b16 %v708, %v704
    %v941 = vpack.c.b16 %v713, %v709
    %v942 = vpack.c.b16 %v714, %v710
    %v943 = vpack.c.b16 %v715, %v711
    %v944 = vpack.c.b16 %v716, %v712
    %v945 = vpack.c.b16 %v721, %v717
    %v946 = vpack.c.b16 %v722, %v718
    %v947 = vpack.c.b16 %v723, %v719
    %v948 = vpack.c.b16 %v724, %v720
    %v949 = vpack.c.b16 %v729, %v725
    %v950 = vpack.c.b16 %v730, %v726
    %v951 = vpack.c.b16 %v731, %v727
    %v952 = vpack.c.b16 %v732, %v728
    %v953 = vpack.c.b16 %v737, %v733
    %v954 = vpack.c.b16 %v738, %v734
    %v955 = vpack.c.b16 %v739, %v735
    %v956 = vpack.c.b16 %v740, %v736
    %v957 = vpack.c.b16 %v745, %v741
    %v958 = vpack.c.b16 %v746, %v742
    %v959 = vpack.c.b16 %v747, %v743
    %v960 = vpack.c.b16 %v748, %v744
    %v961 = vpack.c.b16 %v753, %v749
    %v962 = vpack.c.b16 %v754, %v750
    %v963 = vpack.c.b16 %v755, %v751
    %v964 = vpack.c.b16 %v756, %v752
    %v965 = vpack.c.b16 %v761, %v757
    %v966 = vpack.c.b16 %v762, %v758
    %v967 = vpack.c.b16 %v763, %v759
    %v968 = vpack.c.b16 %v764, %v760
    %v969 = vpack.c.b16 %v769, %v765
    %v970 = vpack.c.b16 %v770, %v766
    %v971 = vpack.c.b16 %v771, %v767
    %v972 = vpack.c.b16 %v772, %v768
    %v973 = vpack.c.b16 %v777, %v773
    %v974 = vpack.c.b16 %v778, %v774
    %v975 = vpack.c.b16 %v779, %v775
    %v976 = vpack.c.b16 %v780, %v776
    %v977 = vpack.c.b16 %v785, %v781
    %v978 = vpack.c.b16 %v786, %v782
    %v979 = vpack.c.b16 %v787, %v783
    %v980 = vpack.c.b16 %v788, %v784
    %v981 = vpack.c.b16 %v793, %v789
    %v982 = vpack.c.b16 %v794, %v790
    %v983 = vpack.c.b16 %v795, %v791
    %v984 = vpack.c.b16 %v796, %v792
    %v985 = vpack.c.b16 %v801, %v797
    %v986 = vpack.c.b16 %v802, %v798
    %v987 = vpack.c.b16 %v803, %v799
    %v988 = vpack.c.b16 %v804, %v800
    %v989 = vpack.c.b16 %v809, %v805
    %v990 = vpack.c.b16 %v810, %v806
    %v991 = vpack.c.b16 %v811, %v807
    %v992 = vpack.c.b16 %v812, %v808
    %v993 = vpack.c.b16 %v817, %v813
    %v994 = vpack.c.b16 %v818, %v814
    %v995 = vpack.c.b16 %v819, %v815
    %v996 = vpack.c.b16 %v820, %v816
    %v997 = vpack.c.b16 %v825, %v821
    %v998 = vpack.c.b16 %v826, %v822
    %v999 = vpack.c.b16 %v827, %v823
    %v1000 = vpack.c.b16 %v828, %v824
    %v1001 = vpack.c.b16 %v833, %v829
    %v1002 = vpack.c.b16 %v834, %v830
    %v1003 = vpack.c.b16 %v835, %v831
    %v1004 = vpack.c.b16 %v836, %v832
    %v1005 = vpack.c.b16 %v841, %v837
    %v1006 = vpack.c.b16 %v842, %v838
    %v1007 = vpack.c.b16 %v843, %v839
    %v1008 = vpack.c.b16 %v844, %v840
    %v1009 = vpack.c.b16 %v849, %v845
    %v1010 = vpack.c.b16 %v850, %v846
    %v1011 = vpack.c.b16 %v851, %v847
    %v1012 = vpack.c.b16 %v852, %v848
    %v1013 = vpack.c.b16 %v857, %v853
    %v1014 = vpack.c.b16 %v858, %v854
    %v1015 = vpack.c.b16 %v859, %v855
    %v1016 = vpack.c.b16 %v860, %v856
    %v1017 = vpack.c.b16 %v865, %v861
    %v1018 = vpack.c.b16 %v866, %v862
    %v1019 = vpack.c.b16 %v867, %v863
    %v1020 = vpack.c.b16 %v868, %v864
    %v1021 = vpack.c.b16 %v873, %v869
    %v1022 = vpack.c.b16 %v874, %v870
    %v1023 = vpack.c.b16 %v875, %v871
    %v1024 = vpack.c.b16 %v876, %v872
    %v1025 = vpack.c.b16 %v881, %v877
    %v1026 = vpack.c.b16 %v882, %v878
    %v1027 = vpack.c.b16 %v883, %v879
    %v1028 = vpack.c.b16 %v884, %v880
    %v1029 = vpack.c.b16 %v889, %v885
    %v1030 = vpack.c.b16 %v890, %v886
    %v1031 = vpack.c.b16 %v891, %v887
    %v1032 = vpack.c.b16 %v892, %v888
    %v1033 = vpack.c.b16 %v897, %v893
    %v1034 = vpack.c.b16 %v898, %v894
    %v1035 = vpack.c.b16 %v899, %v895
    %v1036 = vpack.c.b16 %v900, %v896
    %v1037 = vpack.c.b16 %v905, %v901
    %v1038 = vpack.c.b16 %v906, %v902
    %v1039 = vpack.c.b16 %v907, %v903
    %v1040 = vpack.c.b16 %v908, %v904
    %v1041 = vpack.c.b16 %v913, %v909
    %v1042 = vpack.c.b16 %v914, %v910
    %v1043 = vpack.c.b16 %v915, %v911
    %v1044 = vpack.c.b16 %v916, %v912
    %1173 = vmatprep.subr.bf16.mxu0 %v946
    %1174 = vmatpush1.bf16.msra.mxu0 %v945
    %1175 = vmatprep.subr.bf16.mxu0 %v942
    %1176 = vmatpush1.bf16.msra.mxu0 %v941
    %1177 = vmatprep.subr.bf16.mxu0 %v938
    %1178 = vmatpush1.bf16.msra.mxu0 %v937
    %1179 = vmatprep.subr.bf16.mxu0 %v934
    %1180 = vmatpush1.bf16.msra.mxu0 %v933
    %1181 = vmatprep.subr.bf16.mxu0 %v930
    %1182 = vmatpush1.bf16.msra.mxu0 %v929
    %1183 = vmatprep.subr.bf16.mxu0 %v926
    %1184 = vmatpush1.bf16.msra.mxu0 %v925
    %1185 = vmatprep.subr.bf16.mxu0 %v922
    %1186 = vmatpush1.bf16.msra.mxu0 %v921
    %1187 = vmatprep.subr.bf16.mxu0 %v918
    %1188 = vmatpush1.bf16.msra.mxu0 %v917
    %1189 = vmatprep.subr.bf16.mxu0 %v978
    %1190 = vmatpush2.bf16.msra.mxu0 %v977
    %1191 = vmatprep.subr.bf16.mxu0 %v974
    %1192 = vmatpush2.bf16.msra.mxu0 %v973
    %1193 = vmatprep.subr.bf16.mxu0 %v970
    %1194 = vmatpush2.bf16.msra.mxu0 %v969
    %1195 = vmatprep.subr.bf16.mxu0 %v966
    %1196 = vmatpush2.bf16.msra.mxu0 %v965
    %1197 = vmatprep.subr.bf16.mxu0 %v962
    %1198 = vmatpush2.bf16.msra.mxu0 %v961
    %1199 = vmatprep.subr.bf16.mxu0 %v958
    %1200 = vmatpush2.bf16.msra.mxu0 %v957
    %1201 = vmatprep.subr.bf16.mxu0 %v954
    %1202 = vmatpush2.bf16.msra.mxu0 %v953
    %1203 = vmatprep.subr.bf16.mxu0 %v950
    %1204 = vmatpush2.bf16.msra.mxu0 %v949
    %1205 = vmatprep.mubr.bf16.mxu0 %v402
    %1206 = vmatmul.mubr.bf16.gmra.mxu0 %v401
    %v1207 = vpop.f32.mrf.mxu0
    %v1208 = vadd.f32 0.0, %v1207
    %v1209 = vpop.f32.mrf.mxu0
    %v1210 = vadd.f32 0.0, %v1209
    %v1211 = vpop.f32.mrf.mxu0
    %v1212 = vadd.f32 0.0, %v1211
    %v1213 = vpop.f32.mrf.mxu0
    %v1214 = vadd.f32 0.0, %v1213
    %1215 = vdwg.mxu0
    %1216 = vmatprep.subr.bf16.mxu0 %v1010
    %1217 = vmatpush1.bf16.msra.mxu0 %v1009
    %1218 = vmatprep.subr.bf16.mxu0 %v1006
    %1219 = vmatpush1.bf16.msra.mxu0 %v1005
    %1220 = vmatprep.subr.bf16.mxu0 %v1002
    %1221 = vmatpush1.bf16.msra.mxu0 %v1001
    %1222 = vmatprep.subr.bf16.mxu0 %v998
    %1223 = vmatpush1.bf16.msra.mxu0 %v997
    %1224 = vmatprep.subr.bf16.mxu0 %v994
    %1225 = vmatpush1.bf16.msra.mxu0 %v993
    %1226 = vmatprep.subr.bf16.mxu0 %v990
    %1227 = vmatpush1.bf16.msra.mxu0 %v989
    %1228 = vmatprep.subr.bf16.mxu0 %v986
    %1229 = vmatpush1.bf16.msra.mxu0 %v985
    %1230 = vmatprep.subr.bf16.mxu0 %v982
    %1231 = vmatpush1.bf16.msra.mxu0 %v981
    %1232 = vmatprep.subr.bf16.mxu0 %v1042
    %1233 = vmatpush2.bf16.msra.mxu0 %v1041
    %1234 = vmatprep.subr.bf16.mxu0 %v1038
    %1235 = vmatpush2.bf16.msra.mxu0 %v1037
    %1236 = vmatprep.subr.bf16.mxu0 %v1034
    %1237 = vmatpush2.bf16.msra.mxu0 %v1033
    %1238 = vmatprep.subr.bf16.mxu0 %v1030
    %1239 = vmatpush2.bf16.msra.mxu0 %v1029
    %1240 = vmatprep.subr.bf16.mxu0 %v1026
    %1241 = vmatpush2.bf16.msra.mxu0 %v1025
    %1242 = vmatprep.subr.bf16.mxu0 %v1022
    %1243 = vmatpush2.bf16.msra.mxu0 %v1021
    %1244 = vmatprep.subr.bf16.mxu0 %v1018
    %1245 = vmatpush2.bf16.msra.mxu0 %v1017
    %1246 = vmatprep.subr.bf16.mxu0 %v1014
    %1247 = vmatpush2.bf16.msra.mxu0 %v1013
    %1248 = vmatprep.mubr.bf16.mxu0 %v404
    %1249 = vmatmul.mubr.bf16.gmra.mxu0 %v403
    %v1250 = vpop.f32.mrf.mxu0
    %v1251 = vadd.f32 %v1208, %v1250
    %v1252 = vpop.f32.mrf.mxu0
    %v1253 = vadd.f32 %v1210, %v1252
    %v1254 = vpop.f32.mrf.mxu0
    %v1255 = vadd.f32 %v1212, %v1254
    %v1256 = vpop.f32.mrf.mxu0
    %v1257 = vadd.f32 %v1214, %v1256
    %1258 = vdwg.mxu0
    %1259 = vmatprep.subr.bf16.mxu0 %v948
    %1260 = vmatpush1.bf16.msra.mxu0 %v947
    %1261 = vmatprep.subr.bf16.mxu0 %v944
    %1262 = vmatpush1.bf16.msra.mxu0 %v943
    %1263 = vmatprep.subr.bf16.mxu0 %v940
    %1264 = vmatpush1.bf16.msra.mxu0 %v939
    %1265 = vmatprep.subr.bf16.mxu0 %v936
    %1266 = vmatpush1.bf16.msra.mxu0 %v935
    %1267 = vmatprep.subr.bf16.mxu0 %v932
    %1268 = vmatpush1.bf16.msra.mxu0 %v931
    %1269 = vmatprep.subr.bf16.mxu0 %v928
    %1270 = vmatpush1.bf16.msra.mxu0 %v927
    %1271 = vmatprep.subr.bf16.mxu0 %v924
    %1272 = vmatpush1.bf16.msra.mxu0 %v923
    %1273 = vmatprep.subr.bf16.mxu0 %v920
    %1274 = vmatpush1.bf16.msra.mxu0 %v919
    %1275 = vmatprep.subr.bf16.mxu0 %v980
    %1276 = vmatpush2.bf16.msra.mxu0 %v979
    %1277 = vmatprep.subr.bf16.mxu0 %v976
    %1278 = vmatpush2.bf16.msra.mxu0 %v975
    %1279 = vmatprep.subr.bf16.mxu0 %v972
    %1280 = vmatpush2.bf16.msra.mxu0 %v971
    %1281 = vmatprep.subr.bf16.mxu0 %v968
    %1282 = vmatpush2.bf16.msra.mxu0 %v967
    %1283 = vmatprep.subr.bf16.mxu0 %v964
    %1284 = vmatpush2.bf16.msra.mxu0 %v963
    %1285 = vmatprep.subr.bf16.mxu0 %v960
    %1286 = vmatpush2.bf16.msra.mxu0 %v959
    %1287 = vmatprep.subr.bf16.mxu0 %v956
    %1288 = vmatpush2.bf16.msra.mxu0 %v955
    %1289 = vmatprep.subr.bf16.mxu0 %v952
    %1290 = vmatpush2.bf16.msra.mxu0 %v951
    %1291 = vmatprep.mubr.bf16.mxu0 %v402
    %1292 = vmatmul.mubr.bf16.gmra.mxu0 %v401
    %v1293 = vpop.f32.mrf.mxu0
    %v1294 = vadd.f32 0.0, %v1293
    %v1295 = vpop.f32.mrf.mxu0
    %v1296 = vadd.f32 0.0, %v1295
    %v1297 = vpop.f32.mrf.mxu0
    %v1298 = vadd.f32 0.0, %v1297
    %v1299 = vpop.f32.mrf.mxu0
    %v1300 = vadd.f32 0.0, %v1299
    %1301 = vdwg.mxu0
    %1302 = vmatprep.subr.bf16.mxu0 %v1012
    %1303 = vmatpush1.bf16.msra.mxu0 %v1011
    %1304 = vmatprep.subr.bf16.mxu0 %v1008
    %1305 = vmatpush1.bf16.msra.mxu0 %v1007
    %1306 = vmatprep.subr.bf16.mxu0 %v1004
    %1307 = vmatpush1.bf16.msra.mxu0 %v1003
    %1308 = vmatprep.subr.bf16.mxu0 %v1000
    %1309 = vmatpush1.bf16.msra.mxu0 %v999
    %1310 = vmatprep.subr.bf16.mxu0 %v996
    %1311 = vmatpush1.bf16.msra.mxu0 %v995
    %1312 = vmatprep.subr.bf16.mxu0 %v992
    %1313 = vmatpush1.bf16.msra.mxu0 %v991
    %1314 = vmatprep.subr.bf16.mxu0 %v988
    %1315 = vmatpush1.bf16.msra.mxu0 %v987
    %1316 = vmatprep.subr.bf16.mxu0 %v984
    %1317 = vmatpush1.bf16.msra.mxu0 %v983
    %1318 = vmatprep.subr.bf16.mxu0 %v1044
    %1319 = vmatpush2.bf16.msra.mxu0 %v1043
    %1320 = vmatprep.subr.bf16.mxu0 %v1040
    %1321 = vmatpush2.bf16.msra.mxu0 %v1039
    %1322 = vmatprep.subr.bf16.mxu0 %v1036
    %1323 = vmatpush2.bf16.msra.mxu0 %v1035
    %1324 = vmatprep.subr.bf16.mxu0 %v1032
    %1325 = vmatpush2.bf16.msra.mxu0 %v1031
    %1326 = vmatprep.subr.bf16.mxu0 %v1028
    %1327 = vmatpush2.bf16.msra.mxu0 %v1027
    %1328 = vmatprep.subr.bf16.mxu0 %v1024
    %1329 = vmatpush2.bf16.msra.mxu0 %v1023
    %1330 = vmatprep.subr.bf16.mxu0 %v1020
    %1331 = vmatpush2.bf16.msra.mxu0 %v1019
    %1332 = vmatprep.subr.bf16.mxu0 %v1016
    %1333 = vmatpush2.bf16.msra.mxu0 %v1015
    %1334 = vmatprep.mubr.bf16.mxu0 %v404
    %1335 = vmatmul.mubr.bf16.gmra.mxu0 %v403
    %v1336 = vpop.f32.mrf.mxu0
    %v1337 = vadd.f32 %v1294, %v1336
    %v1338 = vpop.f32.mrf.mxu0
    %v1339 = vadd.f32 %v1296, %v1338
    %v1340 = vpop.f32.mrf.mxu0
    %v1341 = vadd.f32 %v1298, %v1340
    %v1342 = vpop.f32.mrf.mxu0
    %v1343 = vadd.f32 %v1300, %v1342
    %1344 = vdwg.mxu0
    %v1345 = vpack.c.bf16 %v1255, %v1251
    %v1346 = vpack.c.bf16 %v1257, %v1253
    %1347 = vmatprep.subr.bf16.mxu0 0
    %1348 = vmatpush1.bf16.msra.mxu0 0
    %1349 = vmatprep.subr.bf16.mxu0 0
    %1350 = vmatpush1.bf16.msra.mxu0 0
    %1351 = vmatprep.subr.bf16.mxu0 0
    %1352 = vmatpush1.bf16.msra.mxu0 0
    %1353 = vmatprep.subr.bf16.mxu0 0
    %1354 = vmatpush1.bf16.msra.mxu0 0
    %1355 = vmatprep.subr.bf16.mxu0 0
    %1356 = vmatpush1.bf16.msra.mxu0 0
    %1357 = vmatprep.subr.bf16.mxu0 0
    %1358 = vmatpush1.bf16.msra.mxu0 0
    %1359 = vmatprep.subr.bf16.mxu0 0
    %1360 = vmatpush1.bf16.msra.mxu0 0
    %1361 = vmatprep.subr.bf16.mxu0 %v1346
    %1362 = vmatpush1.bf16.msra.mxu0 %v1345
    %1363 = vmatprep.subr.bf16.mxu0 0
    %1364 = vmatpush2.bf16.msra.mxu0 0
    %1365 = vmatprep.subr.bf16.mxu0 0
    %1366 = vmatpush2.bf16.msra.mxu0 0
    %1367 = vmatprep.subr.bf16.mxu0 0
    %1368 = vmatpush2.bf16.msra.mxu0 0
    %1369 = vmatprep.subr.bf16.mxu0 0
    %1370 = vmatpush2.bf16.msra.mxu0 0
    %1371 = vmatprep.subr.bf16.mxu0 0
    %1372 = vmatpush2.bf16.msra.mxu0 0
    %1373 = vmatprep.subr.bf16.mxu0 0
    %1374 = vmatpush2.bf16.msra.mxu0 0
    %1375 = vmatprep.subr.bf16.mxu0 0
    %1376 = vmatpush2.bf16.msra.mxu0 0
    %1377 = vmatprep.subr.bf16.mxu0 0
    %1378 = vmatpush2.bf16.msra.mxu0 0
    %1379 = vmatprep.mubr.bf16.mxu0 0
    %1380 = vmatmul.mubr.bf16.gmra.mxu0 %v79
    %v1381 = vpop.f32.mrf.mxu0
    %v1382 = vadd.f32 0.0, %v1381
    %v1383 = vpop.f32.mrf.mxu0
    %v1384 = vadd.f32 0.0, %v1383
    %v1385 = vpop.f32.mrf.mxu0
    %v1386 = vadd.f32 0.0, %v1385
    %v1387 = vpop.f32.mrf.mxu0
    %v1388 = vadd.f32 0.0, %v1387
    %1389 = vdwg.mxu0
    %v1390 = vmul.f32 %v1382, %v125
    %v1391 = vmul.f32 %v1384, %v125
    %v1392 = vmul.f32 %v1386, %v130
    %v1393 = vmul.f32 %v1388, %v130
    %v1394 = vadd.f32 %v1390, %v1337
    %v1395 = vadd.f32 %v1391, %v1339
    %v1396 = vadd.f32 %v1392, %v1341
    %v1397 = vadd.f32 %v1393, %v1343
    %v1398 = vld [vmem:[%s7] sm:$0x3]
    %v1400 = vlaneseq
    %v1401 = vshrl.u32 %v1400, 7
    %v1402 = vsub.s32 0, %v1401
    %v1403 = vrot.slane %v1398, %v1402
    %v1404 = vlaneseq
    %v1405 = vshrl.u32 %v1404, 7
    %v1406 = vsub.s32 1, %v1405
    %v1407 = vrot.slane %v1398, %v1406
    %v1410 = vadd.f32 %v1394, %v1403
    %v1411 = vadd.f32 %v1395, %v1407
    %v1412 = vadd.f32 %v1396, %v1403
    %v1413 = vadd.f32 %v1397, %v1407
    %v1414 = vmax.f32 %v1410, 0.0
    %v1415 = vmax.f32 %v1411, 0.0
    %v1416 = vmax.f32 %v1412, 0.0
    %v1417 = vmax.f32 %v1413, 0.0
    %v1418 = vpack.c.bf16 %v1416, %v1414
    %v1419 = vpack.c.bf16 %v1417, %v1415
    %v1420 = vld [vmem:[#allocation5] sm:$0xff]
    %v1421 = vld [vmem:[#allocation5 + $0x8] sm:$0xff]
    %v1422 = vld [vmem:[#allocation5 + $0x10] sm:$0xff]
    %v1423 = vld [vmem:[#allocation5 + $0x18] sm:$0xff]
    %v1424 = vld [vmem:[#allocation5 + $0x20] sm:$0xff]
    %v1425 = vld [vmem:[#allocation5 + $0x28] sm:$0xff]
    %v1426 = vld [vmem:[#allocation5 + $0x30] sm:$0xff]
    %v1427 = vld [vmem:[#allocation5 + $0x38] sm:$0xff]
    %v1428 = vld [vmem:[#allocation5 + $0x40] sm:$0xff]
    %v1429 = vld [vmem:[#allocation5 + $0x48] sm:$0xff]
    %v1430 = vld [vmem:[#allocation5 + $0x50] sm:$0xff]
    %v1431 = vld [vmem:[#allocation5 + $0x58] sm:$0xff]
    %v1432 = vld [vmem:[#allocation5 + $0x60] sm:$0xff]
    %v1433 = vld [vmem:[#allocation5 + $0x68] sm:$0xff]
    %v1434 = vld [vmem:[#allocation5 + $0x70] sm:$0xff]
    %v1435 = vld [vmem:[#allocation5 + $0x78] sm:$0xff]
    %v1436 = vld [vmem:[#allocation5 + $0x80] sm:$0xff]
    %v1437 = vld [vmem:[#allocation5 + $0x88] sm:$0xff]
    %v1438 = vld [vmem:[#allocation5 + $0x90] sm:$0xff]
    %v1439 = vld [vmem:[#allocation5 + $0x98] sm:$0xff]
    %v1440 = vld [vmem:[#allocation5 + $0xa0] sm:$0xff]
    %v1441 = vld [vmem:[#allocation5 + $0xa8] sm:$0xff]
    %v1442 = vld [vmem:[#allocation5 + $0xb0] sm:$0xff]
    %v1443 = vld [vmem:[#allocation5 + $0xb8] sm:$0xff]
    %v1444 = vld [vmem:[#allocation5 + $0xc0] sm:$0xff]
    %v1445 = vld [vmem:[#allocation5 + $0xc8] sm:$0xff]
    %v1446 = vld [vmem:[#allocation5 + $0xd0] sm:$0xff]
    %v1447 = vld [vmem:[#allocation5 + $0xd8] sm:$0xff]
    %v1448 = vld [vmem:[#allocation5 + $0xe0] sm:$0xff]
    %v1449 = vld [vmem:[#allocation5 + $0xe8] sm:$0xff]
    %v1450 = vld [vmem:[#allocation5 + $0xf0] sm:$0xff]
    %v1451 = vld [vmem:[#allocation5 + $0xf8] sm:$0xff]
    %v1484 = vunpack.c.l.b16 %v1420
    %v1485 = vunpack.c.h.b16 %v1420
    %v1486 = vunpack.c.l.b16 %v1421
    %v1487 = vunpack.c.h.b16 %v1421
    %v1488 = vunpack.c.l.b16 %v1422
    %v1489 = vunpack.c.h.b16 %v1422
    %v1490 = vunpack.c.l.b16 %v1423
    %v1491 = vunpack.c.h.b16 %v1423
    %v1492 = vunpack.c.l.b16 %v1424
    %v1493 = vunpack.c.h.b16 %v1424
    %v1494 = vunpack.c.l.b16 %v1425
    %v1495 = vunpack.c.h.b16 %v1425
    %v1496 = vunpack.c.l.b16 %v1426
    %v1497 = vunpack.c.h.b16 %v1426
    %v1498 = vunpack.c.l.b16 %v1427
    %v1499 = vunpack.c.h.b16 %v1427
    %v1500 = vunpack.c.l.b16 %v1428
    %v1501 = vunpack.c.h.b16 %v1428
    %v1502 = vunpack.c.l.b16 %v1429
    %v1503 = vunpack.c.h.b16 %v1429
    %v1504 = vunpack.c.l.b16 %v1430
    %v1505 = vunpack.c.h.b16 %v1430
    %v1506 = vunpack.c.l.b16 %v1431
    %v1507 = vunpack.c.h.b16 %v1431
    %v1508 = vunpack.c.l.b16 %v1432
    %v1509 = vunpack.c.h.b16 %v1432
    %v1510 = vunpack.c.l.b16 %v1433
    %v1511 = vunpack.c.h.b16 %v1433
    %v1512 = vunpack.c.l.b16 %v1434
    %v1513 = vunpack.c.h.b16 %v1434
    %v1514 = vunpack.c.l.b16 %v1435
    %v1515 = vunpack.c.h.b16 %v1435
    %v1516 = vunpack.c.l.b16 %v1436
    %v1517 = vunpack.c.h.b16 %v1436
    %v1518 = vunpack.c.l.b16 %v1437
    %v1519 = vunpack.c.h.b16 %v1437
    %v1520 = vunpack.c.l.b16 %v1438
    %v1521 = vunpack.c.h.b16 %v1438
    %v1522 = vunpack.c.l.b16 %v1439
    %v1523 = vunpack.c.h.b16 %v1439
    %v1524 = vunpack.c.l.b16 %v1440
    %v1525 = vunpack.c.h.b16 %v1440
    %v1526 = vunpack.c.l.b16 %v1441
    %v1527 = vunpack.c.h.b16 %v1441
    %v1528 = vunpack.c.l.b16 %v1442
    %v1529 = vunpack.c.h.b16 %v1442
    %v1530 = vunpack.c.l.b16 %v1443
    %v1531 = vunpack.c.h.b16 %v1443
    %v1532 = vunpack.c.l.b16 %v1444
    %v1533 = vunpack.c.h.b16 %v1444
    %v1534 = vunpack.c.l.b16 %v1445
    %v1535 = vunpack.c.h.b16 %v1445
    %v1536 = vunpack.c.l.b16 %v1446
    %v1537 = vunpack.c.h.b16 %v1446
    %v1538 = vunpack.c.l.b16 %v1447
    %v1539 = vunpack.c.h.b16 %v1447
    %v1540 = vunpack.c.l.b16 %v1448
    %v1541 = vunpack.c.h.b16 %v1448
    %v1542 = vunpack.c.l.b16 %v1449
    %v1543 = vunpack.c.h.b16 %v1449
    %v1544 = vunpack.c.l.b16 %v1450
    %v1545 = vunpack.c.h.b16 %v1450
    %v1546 = vunpack.c.l.b16 %v1451
    %v1547 = vunpack.c.h.b16 %v1451
    %v1548 = vpack.c.b16 %v1486, %v1484
    %v1549 = vpack.c.b16 %v1487, %v1485
    %v1550 = vpack.c.b16 %v1490, %v1488
    %v1551 = vpack.c.b16 %v1491, %v1489
    %v1552 = vpack.c.b16 %v1494, %v1492
    %v1553 = vpack.c.b16 %v1495, %v1493
    %v1554 = vpack.c.b16 %v1498, %v1496
    %v1555 = vpack.c.b16 %v1499, %v1497
    %v1556 = vpack.c.b16 %v1502, %v1500
    %v1557 = vpack.c.b16 %v1503, %v1501
    %v1558 = vpack.c.b16 %v1506, %v1504
    %v1559 = vpack.c.b16 %v1507, %v1505
    %v1560 = vpack.c.b16 %v1510, %v1508
    %v1561 = vpack.c.b16 %v1511, %v1509
    %v1562 = vpack.c.b16 %v1514, %v1512
    %v1563 = vpack.c.b16 %v1515, %v1513
    %v1564 = vpack.c.b16 %v1518, %v1516
    %v1565 = vpack.c.b16 %v1519, %v1517
    %v1566 = vpack.c.b16 %v1522, %v1520
    %v1567 = vpack.c.b16 %v1523, %v1521
    %v1568 = vpack.c.b16 %v1526, %v1524
    %v1569 = vpack.c.b16 %v1527, %v1525
    %v1570 = vpack.c.b16 %v1530, %v1528
    %v1571 = vpack.c.b16 %v1531, %v1529
    %v1572 = vpack.c.b16 %v1534, %v1532
    %v1573 = vpack.c.b16 %v1535, %v1533
    %v1574 = vpack.c.b16 %v1538, %v1536
    %v1575 = vpack.c.b16 %v1539, %v1537
    %v1576 = vpack.c.b16 %v1542, %v1540
    %v1577 = vpack.c.b16 %v1543, %v1541
    %v1578 = vpack.c.b16 %v1546, %v1544
    %v1579 = vpack.c.b16 %v1547, %v1545
    %1612 = vmatprep.subr.bf16.mxu0 %v1563
    %1613 = vmatpush1.bf16.msra.mxu0 %v1562
    %1614 = vmatprep.subr.bf16.mxu0 %v1561
    %1615 = vmatpush1.bf16.msra.mxu0 %v1560
    %1616 = vmatprep.subr.bf16.mxu0 %v1559
    %1617 = vmatpush1.bf16.msra.mxu0 %v1558
    %1618 = vmatprep.subr.bf16.mxu0 %v1557
    %1619 = vmatpush1.bf16.msra.mxu0 %v1556
    %1620 = vmatprep.subr.bf16.mxu0 %v1555
    %1621 = vmatpush1.bf16.msra.mxu0 %v1554
    %1622 = vmatprep.subr.bf16.mxu0 %v1553
    %1623 = vmatpush1.bf16.msra.mxu0 %v1552
    %1624 = vmatprep.subr.bf16.mxu0 %v1551
    %1625 = vmatpush1.bf16.msra.mxu0 %v1550
    %1626 = vmatprep.subr.bf16.mxu0 %v1549
    %1627 = vmatpush1.bf16.msra.mxu0 %v1548
    %1628 = vmatprep.subr.bf16.mxu0 %v1579
    %1629 = vmatpush2.bf16.msra.mxu0 %v1578
    %1630 = vmatprep.subr.bf16.mxu0 %v1577
    %1631 = vmatpush2.bf16.msra.mxu0 %v1576
    %1632 = vmatprep.subr.bf16.mxu0 %v1575
    %1633 = vmatpush2.bf16.msra.mxu0 %v1574
    %1634 = vmatprep.subr.bf16.mxu0 %v1573
    %1635 = vmatpush2.bf16.msra.mxu0 %v1572
    %1636 = vmatprep.subr.bf16.mxu0 %v1571
    %1637 = vmatpush2.bf16.msra.mxu0 %v1570
    %1638 = vmatprep.subr.bf16.mxu0 %v1569
    %1639 = vmatpush2.bf16.msra.mxu0 %v1568
    %1640 = vmatprep.subr.bf16.mxu0 %v1567
    %1641 = vmatpush2.bf16.msra.mxu0 %v1566
    %1642 = vmatprep.subr.bf16.mxu0 %v1565
    %1643 = vmatpush2.bf16.msra.mxu0 %v1564
    %1644 = vmatprep.mubr.bf16.mxu0 %v1419
    %1645 = vmatmul.mubr.bf16.gmra.mxu0 %v1418
    %v1646 = vpop.f32.mrf.mxu0
    %v1647 = vadd.f32 0.0, %v1646
    %v1648 = vpop.f32.mrf.mxu0
    %v1649 = vadd.f32 0.0, %v1648
    %v1650 = vpop.f32.mrf.mxu0
    %v1651 = vadd.f32 0.0, %v1650
    %v1652 = vpop.f32.mrf.mxu0
    %v1653 = vadd.f32 0.0, %v1652
    %1654 = vdwg.mxu0
    %v1655 = vpack.c.bf16 %v1651, %v1647
    %1656 = vmatprep.subr.bf16.mxu0 0
    %1657 = vmatpush1.bf16.msra.mxu0 0
    %1658 = vmatprep.subr.bf16.mxu0 0
    %1659 = vmatpush1.bf16.msra.mxu0 0
    %1660 = vmatprep.subr.bf16.mxu0 0
    %1661 = vmatpush1.bf16.msra.mxu0 0
    %1662 = vmatprep.subr.bf16.mxu0 0
    %1663 = vmatpush1.bf16.msra.mxu0 0
    %1664 = vmatprep.subr.bf16.mxu0 0
    %1665 = vmatpush1.bf16.msra.mxu0 0
    %1666 = vmatprep.subr.bf16.mxu0 0
    %1667 = vmatpush1.bf16.msra.mxu0 0
    %1668 = vmatprep.subr.bf16.mxu0 0
    %1669 = vmatpush1.bf16.msra.mxu0 0
    %1670 = vmatprep.subr.bf16.mxu0 0
    %1671 = vmatpush1.bf16.msra.mxu0 %v1655
    %1672 = vmatprep.subr.bf16.mxu0 0
    %1673 = vmatpush2.bf16.msra.mxu0 0
    %1674 = vmatprep.subr.bf16.mxu0 0
    %1675 = vmatpush2.bf16.msra.mxu0 0
    %1676 = vmatprep.subr.bf16.mxu0 0
    %1677 = vmatpush2.bf16.msra.mxu0 0
    %1678 = vmatprep.subr.bf16.mxu0 0
    %1679 = vmatpush2.bf16.msra.mxu0 0
    %1680 = vmatprep.subr.bf16.mxu0 0
    %1681 = vmatpush2.bf16.msra.mxu0 0
    %1682 = vmatprep.subr.bf16.mxu0 0
    %1683 = vmatpush2.bf16.msra.mxu0 0
    %1684 = vmatprep.subr.bf16.mxu0 0
    %1685 = vmatpush2.bf16.msra.mxu0 0
    %1686 = vmatprep.subr.bf16.mxu0 0
    %1687 = vmatpush2.bf16.msra.mxu0 0
    %1688 = vmatprep.mubr.bf16.mxu0 0
    %1689 = vmatmul.mubr.bf16.gmra.mxu0 %v79
    %v1690 = vpop.f32.mrf.mxu0
    %v1691 = vadd.f32 0.0, %v1690
    %v1692 = vpop.f32.mrf.mxu0
    %v1693 = vpop.f32.mrf.mxu0
    %v1694 = vadd.f32 0.0, %v1693
    %v1695 = vpop.f32.mrf.mxu0
    %1696 = vdwg.mxu0
    %v1697 = vmul.f32 %v1691, %v125
    %v1698 = vmul.f32 %v1694, %v130
    %v1699 = vadd.f32 %v1697, %v1649
    %v1700 = vadd.f32 %v1698, %v1653
    %v1701 = vld [vmem:[%s9] sm:$0x1]
    %v1703 = vlaneseq
    %v1704 = vshrl.u32 %v1703, 7
    %v1705 = vsub.s32 0, %v1704
    %v1706 = vrot.slane %v1701, %v1705
    %v1708 = vadd.f32 %v1699, %v1706
    %v1709 = vadd.f32 %v1700, %v1706
    %v1710 = vmax.f32 %v1708, 0.0
    %v1711 = vmax.f32 %v1709, 0.0
    %1712 = vst [vmem:[#allocation7] sm:$0xff] %v1710
    %1713 = vst [vmem:[#allocation7 + $0x8] sm:$0xff] %v1711
    // Predicated region
    $region50: #{tpu_custom_call.1} parent=1 // pred_check
      _
    $region51: #{tpu_custom_call.1} parent=1 // pred_check_branch
      %1715 = sbr.rel (0) target = $region53
    $region52: #{tpu_custom_call.1} parent=1 // pred_region
      %s1717 = ssub.s32 256, 256
      %1718 = vsyncadd [#allocation4], %s1717
      %s1719 = sshll.u32 [#allocation7], 4
      %s1720 = int_to_ptr.vmem [resolvable:$true] %s1719
      %1725 = dma.vmem_to_hbm [thread:$0]  %s1720, 256, %s10, [#allocation4], 128, 128, 8
    $region53: #{tpu_custom_call.1} parent=1 // pred_fallthru
      _
    // Predicated region
    $region54: #{tpu_custom_call.1} parent=1 // pred_check
      _
    $region55: #{tpu_custom_call.1} parent=1 // pred_check_branch
      %1727 = sbr.rel (0) target = $region57
    $region56: #{tpu_custom_call.1} parent=1 // pred_region
      %1728 = dma.done [#allocation4], 256
    $region57: #{tpu_custom_call.1} parent=1 // pred_fallthru
      _
    %1729 = vsyncpa [#allocation3], 1
    %1730 = vsyncpa [#allocation6], 1
    %1731 = vsyncpa [#allocation4], 1

</llo_original>
